<compile_context>
chip_gen: v7x
topology: tpu7x:2x2x1
jax: 0.10.0
libtpu: 0.0.40
codegen_flags: <defaults>
</compile_context>

<pallas_src>
from functools import partial

import jax
import jax.numpy as jnp
from jax import lax
from jax.experimental import pallas as pl
from jax.experimental.pallas import tpu as pltpu

# ----------------------- configuration (small, Block-like) --------------------
B = 2              # batch
N = 8              # sequence length (tokens)
C = 32             # embedding dim
NUM_HEADS = 4
HEAD_DIM = C // NUM_HEADS
MLP_HIDDEN = int(C * 4.0)          # 128
INIT_VALUES = 0.1                  # > 0 -> gamma_1 / gamma_2 layer-scale path
QKV_BIAS = True
LN_EPS = 1e-5
SCALE = HEAD_DIM ** (-0.5)         # qk_scale=None -> head_dim ** -0.5

# rows of the packed small-vector operand (one lane-dense (VEC_ROWS, 128) slab)
ROW_BQKV, ROW_BPROJ, ROW_BFC1, ROW_BFC2 = range(4)
VEC_ROWS = 4
VEC_W = max(3 * C, MLP_HIDDEN, C)  # 128


# ----------------------------- Pallas kernel ----------------------------------
def block_kernel(x_ref, vec_ref, wqkv_ref, wproj_ref, wfc1_ref, wfc2_ref, o_ref,
                 *, b, n, c, h, hd, mlp_h):
    """Whole Block on one fused (B*N, C) tile (single grid step).

    x_ref/o_ref : (B*N, C)       float32
    vec_ref     : (VEC_ROWS, 128) packed bias rows (f32; added post-MXU)
    wqkv_ref    : (C, 3C)        LN1-affine & scale folded q|k|v weights
    wproj_ref   : (C, C)         gamma_1-folded projection weights
    wfc1_ref    : (C, mlp_h)     LN2-affine folded
    wfc2_ref    : (mlp_h, C)     gamma_2-folded
    Weight refs carry the MXU dtype (f32 or bf16); elementwise math stays f32.
    """
    x = x_ref[...].astype(jnp.float32)                  # (BN, C)
    bn = b * n
    mxu_dt = wqkv_ref.dtype

    def vrow(r, w):
        return vec_ref[r:r + 1, :w]                     # (1, w) f32

    def layernorm(v):                                   # affine folded into W
        mu = jnp.mean(v, axis=-1, keepdims=True)
        d = v - mu
        var = jnp.mean(d * d, axis=-1, keepdims=True)
        return d * lax.rsqrt(var + LN_EPS)

    def mm(a, w_ref):                                   # MXU-boundary cast only
        return jnp.dot(a.astype(mxu_dt), w_ref[...],
                       preferred_element_type=jnp.float32)

    def gelu(v):                                        # exact (erf), nn.GELU default
        return 0.5 * v * (1.0 + lax.erf(v * (2.0 ** -0.5)))

    # ------------- attention branch: x + gamma_1 * Proj(MHSA(LN1(x))) ---------
    z1 = layernorm(x)                                   # (BN, C)
    # one wide matmul for q|k|v; scale & LN-affine pre-folded into the weights,
    # all q/k/v bias terms live in the single (1, 3C) bias row.
    qkv = mm(z1, wqkv_ref) + vrow(ROW_BQKV, 3 * c)      # (BN, 3C) f32

    def heads(t):                                       # (BN, c) -> (B*H, N, hd)
        return t.reshape(b, n, h, hd).transpose(0, 2, 1, 3).reshape(b * h, n, hd)

    q = heads(qkv[:, :c])                               # static lane slices
    k = heads(qkv[:, c:2 * c])
    v = heads(qkv[:, 2 * c:])

    # per-(batch, head) attention is inherently block-diagonal -> batched einsum
    s = jnp.einsum('pqd,pkd->pqk', q.astype(mxu_dt), k.astype(mxu_dt),
                   preferred_element_type=jnp.float32)  # (B*H, N, N)
    s = s - jnp.max(s, axis=-1, keepdims=True)
    p = jnp.exp(s)
    p = p * pl.reciprocal(jnp.sum(p, axis=-1, keepdims=True), approx=True)
    o = jnp.einsum('pqk,pkd->pqd', p.astype(mxu_dt), v.astype(mxu_dt),
                   preferred_element_type=jnp.float32)  # (B*H, N, hd)
    o = o.reshape(b, h, n, hd).transpose(0, 2, 1, 3).reshape(bn, c)

    # one wide output projection (gamma_1 folded into weights & bias)
    x = x + mm(o, wproj_ref) + vrow(ROW_BPROJ, c)       # residual

    # ------------- MLP branch: x + gamma_2 * fc2(GELU(fc1(LN2(x)))) -----------
    z2 = layernorm(x)
    y = mm(z2, wfc1_ref) + vrow(ROW_BFC1, mlp_h)        # (BN, mlp_h)
    y = gelu(y)
    y = mm(y, wfc2_ref) + vrow(ROW_BFC2, c)             # gamma_2 pre-folded

    o_ref[...] = (x + y).astype(o_ref.dtype)


# --------------------- one-time parameter packing ------------------------------
def pack_params(p, *, mxu_dtype=jnp.float32):
    """Transform natural Block params into the kernel layout (one-time, offline).

    Exact folds (no runtime cost, batch-size independent):
      * LN1 gamma into rows of w_qkv; LN1 beta contribution into the qkv bias,
      * attention scale into the q columns / q bias,
      * LN2 gamma/beta into w_fc1 / b_fc1,
      * layer-scale gamma_1 into w_proj / b_proj, gamma_2 into w_fc2 / b_fc2.
    Weights are stored in `mxu_dtype` (bf16 recommended on v6e/v7x); the bias
    slab stays f32 (biases are added after the f32-accumulated matmuls).
    """
    g1, b1 = p["norm1_g"][0], p["norm1_b"][0]
    g2, b2 = p["norm2_g"][0], p["norm2_b"][0]
    ga1, ga2 = p["gamma_1"][0], p["gamma_2"][0]

    wq = p["w_qkv"][:, :C]
    wk = p["w_qkv"][:, C:2 * C]
    wv = p["w_qkv"][:, 2 * C:]
    bq = p["b_qkv"][0, :C]
    bv = p["b_qkv"][0, 2 * C:]

    # fold LN1 gamma into rows, attention scale into the q block
    w_qkv_f = jnp.concatenate([(g1[:, None] * wq) * SCALE,
                               g1[:, None] * wk,
                               g1[:, None] * wv], axis=1)            # (C, 3C)
    # fold LN1 beta into the biases (k bias kept: exact, and it cancels under
    # softmax anyway); scale applied to the full q bias.
    b_qkv_f = jnp.concatenate([(bq + b1 @ wq) * SCALE,
                               b1 @ wk,
                               bv + b1 @ wv])                        # (3C,)

    w_proj_f = p["w_proj"] * ga1[None, :]                            # (C, C)
    b_proj_f = p["b_proj"][0] * ga1

    w_fc1_f = g2[:, None] * p["w_fc1"]                               # (C, mlp_h)
    b_fc1_f = p["b_fc1"][0] + b2 @ p["w_fc1"]

    w_fc2_f = p["w_fc2"] * ga2[None, :]                              # (mlp_h, C)
    b_fc2_f = p["b_fc2"][0] * ga2

    vecs = jnp.zeros((VEC_ROWS, VEC_W), jnp.float32)
    vecs = vecs.at[ROW_BQKV, :3 * C].set(b_qkv_f)
    vecs = vecs.at[ROW_BPROJ, :C].set(b_proj_f)
    vecs = vecs.at[ROW_BFC1, :MLP_HIDDEN].set(b_fc1_f)
    vecs = vecs.at[ROW_BFC2, :C].set(b_fc2_f)

    cast = lambda w: w.astype(mxu_dtype)
    return {"vecs": vecs,
            "w_qkv": cast(w_qkv_f), "w_proj": cast(w_proj_f),
            "w_fc1": cast(w_fc1_f), "w_fc2": cast(w_fc2_f)}


# ------------------------------- wrapper ---------------------------------------
def block_forward(x, kp, *, num_heads=NUM_HEADS):
    """x: (B, N, C) float32.  kp: packed kernel params (see pack_params)."""
    Bx, Nx, Cx = x.shape
    mlp_h = kp["w_fc1"].shape[1]
    x2d = x.reshape(Bx * Nx, Cx)     # fuse batch & tokens -> one dense block

    full = lambda a: pl.BlockSpec(a.shape, lambda i, _nd=a.ndim: (0,) * _nd)

    kernel = partial(block_kernel, b=Bx, n=Nx, c=Cx,
                     h=num_heads, hd=Cx // num_heads, mlp_h=mlp_h)

    out2d = pl.pallas_call(
        kernel,
        out_shape=jax.ShapeDtypeStruct((Bx * Nx, Cx), x.dtype),
        grid_spec=pltpu.PrefetchScalarGridSpec(
            num_scalar_prefetch=0,
            # single grid step: kernel is launch/step-overhead bound at this
            # size.  NOTE(v7x): use grid=(Bx,) + ("parallel",) to use both TCs,
            # and set vmem_limit_bytes at production C/MLP sizes.
            grid=(1,),
            in_specs=[
                full(x2d), full(kp["vecs"]),
                full(kp["w_qkv"]), full(kp["w_proj"]),
                full(kp["w_fc1"]), full(kp["w_fc2"]),
            ],
            out_specs=full(x2d),
        ),
        compiler_params=pltpu.CompilerParams(dimension_semantics=("arbitrary",)),
    )(x2d, kp["vecs"], kp["w_qkv"], kp["w_proj"], kp["w_fc1"], kp["w_fc2"])
    return out2d.reshape(Bx, Nx, Cx)


# --------------------------- pure-JAX reference ---------------------------------
def block_reference(x, p):
    def ln(v, g, b):
        mu = jnp.mean(v, axis=-1, keepdims=True)
        var = jnp.mean((v - mu) ** 2, axis=-1, keepdims=True)
        return (v - mu) / jnp.sqrt(var + LN_EPS) * g[0] + b[0]

    h = ln(x, p["norm1_g"], p["norm1_b"])
    qkv = h @ p["w_qkv"] + p["b_qkv"][0]                               # (B, N, 3C)
    qkv = qkv.reshape(B, N, 3, NUM_HEADS, HEAD_DIM).transpose(2, 0, 3, 1, 4)
    q, k, v = qkv[0] * SCALE, qkv[1], qkv[2]                           # (B, H, N, hd)
    attn = jax.nn.softmax(q @ k.transpose(0, 1, 3, 2), axis=-1)
    a = (attn @ v).transpose(0, 2, 1, 3).reshape(B, N, C)
    a = a @ p["w_proj"] + p["b_proj"][0]
    x = x + p["gamma_1"][0] * a

    h2 = ln(x, p["norm2_g"], p["norm2_b"])
    h2 = jax.nn.gelu(h2 @ p["w_fc1"] + p["b_fc1"][0], approximate=False)
    h2 = h2 @ p["w_fc2"] + p["b_fc2"][0]
    return x + p["gamma_2"][0] * h2


# ------------------------------- main -------------------------------------------
if __name__ == "__main__":
    key = jax.random.PRNGKey(0)
    ks = jax.random.split(key, 12)

    def rnd(k, shape, s=0.05):
        return jax.random.normal(k, shape, dtype=jnp.float32) * s

    params = {
        # LayerNorm 1 / 2 (nn.LayerNorm default init)
        "norm1_g": jnp.ones((1, C), jnp.float32),
        "norm1_b": jnp.zeros((1, C), jnp.float32),
        "norm2_g": jnp.ones((1, C), jnp.float32),
        "norm2_b": jnp.zeros((1, C), jnp.float32),
        # qkv: Linear(C, 3C, bias=False); bias = cat(q_bias, zeros, v_bias)
        "w_qkv": rnd(ks[0], (C, 3 * C)),                 # (in, out) = W.T
        "b_qkv": (jnp.concatenate(
            [rnd(ks[1], (1, C)),                          # q_bias
             jnp.zeros((1, C), jnp.float32),              # zeros for k
             rnd(ks[2], (1, C))], axis=-1) if QKV_BIAS    # v_bias
            else jnp.zeros((1, 3 * C), jnp.float32)),
        # attention output projection
        "w_proj": rnd(ks[3], (C, C)),
        "b_proj": rnd(ks[4], (1, C)),
        # MLP
        "w_fc1": rnd(ks[5], (C, MLP_HIDDEN)),
        "b_fc1": rnd(ks[6], (1, MLP_HIDDEN)),
        "w_fc2": rnd(ks[7], (MLP_HIDDEN, C)),
        "b_fc2": rnd(ks[8], (1, C)),
        # layer scale (init_values * ones(dim))
        "gamma_1": jnp.full((1, C), INIT_VALUES, jnp.float32),
        "gamma_2": jnp.full((1, C), INIT_VALUES, jnp.float32),
    }
    # NOTE: dropout / drop_path are identity in eval mode (drop=0.0), so omitted.

    x = jax.random.normal(ks[9], (B, N, C), dtype=jnp.float32)
    ref = jax.block_until_ready(block_reference(x, params))

    # f32-MXU path: validates exact forward semantics (only approximation is the
    # EUP reciprocal in the softmax denominator).
    kp32 = pack_params(params, mxu_dtype=jnp.float32)
    out = jax.block_until_ready(block_forward(x, kp32))
    assert out.shape == (B, N, C), out.shape
    assert jnp.allclose(out, ref, atol=2e-4, rtol=2e-4), \
        float(jnp.max(jnp.abs(out - ref)))

    # bf16-at-MXU-boundary path (recommended on v6e/v7x; elementwise stays f32).
    kp16 = pack_params(params, mxu_dtype=jnp.bfloat16)
    out16 = jax.block_until_ready(block_forward(x, kp16))
    assert jnp.allclose(out16, ref, atol=3e-2, rtol=3e-2), \
        float(jnp.max(jnp.abs(out16 - ref)))

    print("KERNEL_OK")
</pallas_src>

<mosaic_0001>
module attributes {stable_mosaic.version = 11 : i64} {
  func.func @block_kernel(%arg0: i32, %arg1: memref<16x32xf32, #tpu.memory_space<vmem>>, %arg2: memref<4x128xf32, #tpu.memory_space<vmem>>, %arg3: memref<32x96xf32, #tpu.memory_space<vmem>>, %arg4: memref<32x32xf32, #tpu.memory_space<vmem>>, %arg5: memref<32x128xf32, #tpu.memory_space<vmem>>, %arg6: memref<128x32xf32, #tpu.memory_space<vmem>>, %arg7: memref<16x32xf32, #tpu.memory_space<vmem>>) attributes {dimension_semantics = [#tpu.dimension_semantics<arbitrary>], iteration_bounds = array<i64: 1>, scalar_prefetch = 0 : i64, scratch_operands = 0 : i64, tpu.core_type = #tpu.core_type<tc>, window_params = [{pipeline_mode = #tpu.pipeline_mode<synchronous>, transform_indices = @transform_0, window_bounds = array<i64: 16, 32>}, {pipeline_mode = #tpu.pipeline_mode<synchronous>, transform_indices = @transform_1, window_bounds = array<i64: 4, 128>}, {pipeline_mode = #tpu.pipeline_mode<synchronous>, transform_indices = @transform_2, window_bounds = array<i64: 32, 96>}, {pipeline_mode = #tpu.pipeline_mode<synchronous>, transform_indices = @transform_3, window_bounds = array<i64: 32, 32>}, {pipeline_mode = #tpu.pipeline_mode<synchronous>, transform_indices = @transform_4, window_bounds = array<i64: 32, 128>}, {pipeline_mode = #tpu.pipeline_mode<synchronous>, transform_indices = @transform_5, window_bounds = array<i64: 128, 32>}, {pipeline_mode = #tpu.pipeline_mode<synchronous>, transform_indices = @transform_6, window_bounds = array<i64: 16, 32>}]} {
    %c0 = arith.constant 0 : index
    %c0_0 = arith.constant 0 : index
    %0 = vector.load %arg1[%c0, %c0_0] : memref<16x32xf32, #tpu.memory_space<vmem>>, vector<16x32xf32>
    %cst = arith.constant dense<0.000000e+00> : vector<16xf32>
    %1 = vector.multi_reduction <add>, %0, %cst [1] : vector<16x32xf32> to vector<16xf32>
    %2 = vector.shape_cast %1 : vector<16xf32> to vector<16x1xf32>
    %cst_1 = arith.constant 3.200000e+01 : f32
    %3 = vector.broadcast %cst_1 : f32 to vector<16x1xf32>
    %4 = arith.divf %2, %3 : vector<16x1xf32>
    %5 = vector.broadcast %4 : vector<16x1xf32> to vector<16x32xf32>
    %6 = arith.subf %0, %5 : vector<16x32xf32>
    %7 = arith.mulf %6, %6 : vector<16x32xf32>
    %cst_2 = arith.constant dense<0.000000e+00> : vector<16xf32>
    %8 = vector.multi_reduction <add>, %7, %cst_2 [1] : vector<16x32xf32> to vector<16xf32>
    %9 = vector.shape_cast %8 : vector<16xf32> to vector<16x1xf32>
    %cst_3 = arith.constant 3.200000e+01 : f32
    %10 = vector.broadcast %cst_3 : f32 to vector<16x1xf32>
    %11 = arith.divf %9, %10 : vector<16x1xf32>
    %cst_4 = arith.constant 9.99999974E-6 : f32
    %12 = vector.broadcast %cst_4 : f32 to vector<16x1xf32>
    %13 = arith.addf %11, %12 : vector<16x1xf32>
    %14 = math.rsqrt %13 : vector<16x1xf32>
    %15 = vector.broadcast %14 : vector<16x1xf32> to vector<16x32xf32>
    %16 = arith.mulf %6, %15 : vector<16x32xf32>
    %c0_5 = arith.constant 0 : index
    %c0_6 = arith.constant 0 : index
    %17 = vector.load %arg3[%c0_5, %c0_6] : memref<32x96xf32, #tpu.memory_space<vmem>>, vector<32x96xf32>
    %cst_7 = arith.constant dense<0.000000e+00> : vector<16x96xf32>
    %18 = tpu.matmul %16, %17, %cst_7 {dimension_numbers = #tpu.dot_dimension_numbers<[1], [0], [0], [1], [0, 0, 1, 1], [], []>} : vector<16x32xf32>, vector<32x96xf32>, vector<16x96xf32> -> vector<16x96xf32>
    %c0_8 = arith.constant 0 : index
    %c0_9 = arith.constant 0 : index
    %19 = vector.load %arg2[%c0_8, %c0_9] : memref<4x128xf32, #tpu.memory_space<vmem>>, vector<1x96xf32>
    %20 = vector.broadcast %19 : vector<1x96xf32> to vector<16x96xf32>
    %21 = arith.addf %18, %20 : vector<16x96xf32>
    %22 = vector.extract_strided_slice %21 {offsets = [0, 0], sizes = [16, 32], strides = [1, 1]} : vector<16x96xf32> to vector<16x32xf32>
    %23 = vector.shape_cast %22 : vector<16x32xf32> to vector<2x8x4x8xf32>
    %24 = tpu.transpose %23, [0, 2, 1, 3] : vector<2x8x4x8xf32> -> vector<2x4x8x8xf32>
    %25 = vector.shape_cast %24 : vector<2x4x8x8xf32> to vector<8x8x8xf32>
    %26 = vector.extract_strided_slice %21 {offsets = [0, 32], sizes = [16, 32], strides = [1, 1]} : vector<16x96xf32> to vector<16x32xf32>
    %27 = vector.shape_cast %26 : vector<16x32xf32> to vector<2x8x4x8xf32>
    %28 = tpu.transpose %27, [0, 2, 1, 3] : vector<2x8x4x8xf32> -> vector<2x4x8x8xf32>
    %29 = vector.shape_cast %28 : vector<2x4x8x8xf32> to vector<8x8x8xf32>
    %30 = vector.extract_strided_slice %21 {offsets = [0, 64], sizes = [16, 32], strides = [1, 1]} : vector<16x96xf32> to vector<16x32xf32>
    %31 = vector.shape_cast %30 : vector<16x32xf32> to vector<2x8x4x8xf32>
    %32 = tpu.transpose %31, [0, 2, 1, 3] : vector<2x8x4x8xf32> -> vector<2x4x8x8xf32>
    %33 = vector.shape_cast %32 : vector<2x4x8x8xf32> to vector<8x8x8xf32>
    "tpu.trace_start"() <{level = 10 : i32, message = "pqd,pkd->pqk"}> : () -> ()
    %cst_10 = arith.constant dense<0.000000e+00> : vector<8x8x8xf32>
    %34 = tpu.matmul %25, %29, %cst_10 {dimension_numbers = #tpu.dot_dimension_numbers<[2], [2], [1], [1], [0, 0, 0, 1, 1, 1], [0], [0]>} : vector<8x8x8xf32>, vector<8x8x8xf32>, vector<8x8x8xf32> -> vector<8x8x8xf32>
    "tpu.trace_stop"() : () -> ()
    %cst_11 = arith.constant dense<0xFF800000> : vector<8x8xf32>
    %35 = vector.multi_reduction <maximumf>, %34, %cst_11 [2] : vector<8x8x8xf32> to vector<8x8xf32>
    %36 = vector.shape_cast %35 : vector<8x8xf32> to vector<8x8x1xf32>
    %37 = vector.broadcast %36 : vector<8x8x1xf32> to vector<8x8x8xf32>
    %38 = arith.subf %34, %37 : vector<8x8x8xf32>
    %39 = math.exp %38 : vector<8x8x8xf32>
    %cst_12 = arith.constant dense<0.000000e+00> : vector<8x8xf32>
    %40 = vector.multi_reduction <add>, %39, %cst_12 [2] : vector<8x8x8xf32> to vector<8x8xf32>
    %41 = vector.shape_cast %40 : vector<8x8xf32> to vector<8x8x1xf32>
    %42 = tpu.reciprocal %41 {approx = true} : vector<8x8x1xf32> -> vector<8x8x1xf32>
    %43 = vector.broadcast %42 : vector<8x8x1xf32> to vector<8x8x8xf32>
    %44 = arith.mulf %39, %43 : vector<8x8x8xf32>
    "tpu.trace_start"() <{level = 10 : i32, message = "pqk,pkd->pqd"}> : () -> ()
    %cst_13 = arith.constant dense<0.000000e+00> : vector<8x8x8xf32>
    %45 = tpu.matmul %44, %33, %cst_13 {dimension_numbers = #tpu.dot_dimension_numbers<[2], [1], [1], [2], [0, 0, 0, 1, 1, 2], [0], [0]>} : vector<8x8x8xf32>, vector<8x8x8xf32>, vector<8x8x8xf32> -> vector<8x8x8xf32>
    "tpu.trace_stop"() : () -> ()
    %46 = vector.shape_cast %45 : vector<8x8x8xf32> to vector<2x4x8x8xf32>
    %47 = tpu.transpose %46, [0, 2, 1, 3] : vector<2x4x8x8xf32> -> vector<2x8x4x8xf32>
    %48 = vector.shape_cast %47 : vector<2x8x4x8xf32> to vector<16x32xf32>
    %c0_14 = arith.constant 0 : index
    %c0_15 = arith.constant 0 : index
    %49 = vector.load %arg4[%c0_14, %c0_15] : memref<32x32xf32, #tpu.memory_space<vmem>>, vector<32x32xf32>
    %cst_16 = arith.constant dense<0.000000e+00> : vector<16x32xf32>
    %50 = tpu.matmul %48, %49, %cst_16 {dimension_numbers = #tpu.dot_dimension_numbers<[1], [0], [0], [1], [0, 0, 1, 1], [], []>} : vector<16x32xf32>, vector<32x32xf32>, vector<16x32xf32> -> vector<16x32xf32>
    %51 = arith.addf %0, %50 : vector<16x32xf32>
    %c1 = arith.constant 1 : index
    %c0_17 = arith.constant 0 : index
    %52 = vector.load %arg2[%c1, %c0_17] : memref<4x128xf32, #tpu.memory_space<vmem>>, vector<1x32xf32>
    %53 = vector.broadcast %52 : vector<1x32xf32> to vector<16x32xf32>
    %54 = arith.addf %51, %53 : vector<16x32xf32>
    %cst_18 = arith.constant dense<0.000000e+00> : vector<16xf32>
    %55 = vector.multi_reduction <add>, %54, %cst_18 [1] : vector<16x32xf32> to vector<16xf32>
    %56 = vector.shape_cast %55 : vector<16xf32> to vector<16x1xf32>
    %cst_19 = arith.constant 3.200000e+01 : f32
    %57 = vector.broadcast %cst_19 : f32 to vector<16x1xf32>
    %58 = arith.divf %56, %57 : vector<16x1xf32>
    %59 = vector.broadcast %58 : vector<16x1xf32> to vector<16x32xf32>
    %60 = arith.subf %54, %59 : vector<16x32xf32>
    %61 = arith.mulf %60, %60 : vector<16x32xf32>
    %cst_20 = arith.constant dense<0.000000e+00> : vector<16xf32>
    %62 = vector.multi_reduction <add>, %61, %cst_20 [1] : vector<16x32xf32> to vector<16xf32>
    %63 = vector.shape_cast %62 : vector<16xf32> to vector<16x1xf32>
    %cst_21 = arith.constant 3.200000e+01 : f32
    %64 = vector.broadcast %cst_21 : f32 to vector<16x1xf32>
    %65 = arith.divf %63, %64 : vector<16x1xf32>
    %cst_22 = arith.constant 9.99999974E-6 : f32
    %66 = vector.broadcast %cst_22 : f32 to vector<16x1xf32>
    %67 = arith.addf %65, %66 : vector<16x1xf32>
    %68 = math.rsqrt %67 : vector<16x1xf32>
    %69 = vector.broadcast %68 : vector<16x1xf32> to vector<16x32xf32>
    %70 = arith.mulf %60, %69 : vector<16x32xf32>
    %c0_23 = arith.constant 0 : index
    %c0_24 = arith.constant 0 : index
    %71 = vector.load %arg5[%c0_23, %c0_24] : memref<32x128xf32, #tpu.memory_space<vmem>>, vector<32x128xf32>
    %cst_25 = arith.constant dense<0.000000e+00> : vector<16x128xf32>
    %72 = tpu.matmul %70, %71, %cst_25 {dimension_numbers = #tpu.dot_dimension_numbers<[1], [0], [0], [1], [0, 0, 1, 1], [], []>} : vector<16x32xf32>, vector<32x128xf32>, vector<16x128xf32> -> vector<16x128xf32>
    %c2 = arith.constant 2 : index
    %c0_26 = arith.constant 0 : index
    %73 = vector.load %arg2[%c2, %c0_26] : memref<4x128xf32, #tpu.memory_space<vmem>>, vector<1x128xf32>
    %74 = vector.broadcast %73 : vector<1x128xf32> to vector<16x128xf32>
    %75 = arith.addf %72, %74 : vector<16x128xf32>
    %cst_27 = arith.constant 5.000000e-01 : f32
    %76 = vector.broadcast %cst_27 : f32 to vector<16x128xf32>
    %77 = arith.mulf %76, %75 : vector<16x128xf32>
    %cst_28 = arith.constant 0.707106769 : f32
    %78 = vector.broadcast %cst_28 : f32 to vector<16x128xf32>
    %79 = arith.mulf %75, %78 : vector<16x128xf32>
    %80 = math.erf %79 : vector<16x128xf32>
    %cst_29 = arith.constant 1.000000e+00 : f32
    %81 = vector.broadcast %cst_29 : f32 to vector<16x128xf32>
    %82 = arith.addf %81, %80 : vector<16x128xf32>
    %83 = arith.mulf %77, %82 : vector<16x128xf32>
    %c0_30 = arith.constant 0 : index
    %c0_31 = arith.constant 0 : index
    %84 = vector.load %arg6[%c0_30, %c0_31] : memref<128x32xf32, #tpu.memory_space<vmem>>, vector<128x32xf32>
    %cst_32 = arith.constant dense<0.000000e+00> : vector<16x32xf32>
    %85 = tpu.matmul %83, %84, %cst_32 {dimension_numbers = #tpu.dot_dimension_numbers<[1], [0], [0], [1], [0, 0, 1, 1], [], []>} : vector<16x128xf32>, vector<128x32xf32>, vector<16x32xf32> -> vector<16x32xf32>
    %c3 = arith.constant 3 : index
    %c0_33 = arith.constant 0 : index
    %86 = vector.load %arg2[%c3, %c0_33] : memref<4x128xf32, #tpu.memory_space<vmem>>, vector<1x32xf32>
    %87 = vector.broadcast %86 : vector<1x32xf32> to vector<16x32xf32>
    %88 = arith.addf %85, %87 : vector<16x32xf32>
    %89 = arith.addf %54, %88 : vector<16x32xf32>
    %c0_34 = arith.constant 0 : index
    %c0_35 = arith.constant 0 : index
    %90 = vector.load %arg7[%c0_34, %c0_35] : memref<16x32xf32, #tpu.memory_space<vmem>>, vector<16x32xf32>
    tpu.vector_store %arg7[%c0_34, %c0_35], %89 {strides = array<i32>} : memref<16x32xf32, #tpu.memory_space<vmem>>, vector<16x32xf32>,
    return
  }
  func.func @transform_0(%arg0: i32) -> (i32, i32) {
    %c0_i32 = arith.constant 0 : i32
    %c0_i32_0 = arith.constant 0 : i32
    %c0_i32_1 = arith.constant 0 : i32
    return %c0_i32, %c0_i32_0 : i32, i32
  }
  func.func @transform_1(%arg0: i32) -> (i32, i32) {
    %c0_i32 = arith.constant 0 : i32
    %c0_i32_0 = arith.constant 0 : i32
    %c0_i32_1 = arith.constant 0 : i32
    return %c0_i32, %c0_i32_0 : i32, i32
  }
  func.func @transform_2(%arg0: i32) -> (i32, i32) {
    %c0_i32 = arith.constant 0 : i32
    %c0_i32_0 = arith.constant 0 : i32
    %c0_i32_1 = arith.constant 0 : i32
    return %c0_i32, %c0_i32_0 : i32, i32
  }
  func.func @transform_3(%arg0: i32) -> (i32, i32) {
    %c0_i32 = arith.constant 0 : i32
    %c0_i32_0 = arith.constant 0 : i32
    %c0_i32_1 = arith.constant 0 : i32
    return %c0_i32, %c0_i32_0 : i32, i32
  }
  func.func @transform_4(%arg0: i32) -> (i32, i32) {
    %c0_i32 = arith.constant 0 : i32
    %c0_i32_0 = arith.constant 0 : i32
    %c0_i32_1 = arith.constant 0 : i32
    return %c0_i32, %c0_i32_0 : i32, i32
  }
  func.func @transform_5(%arg0: i32) -> (i32, i32) {
    %c0_i32 = arith.constant 0 : i32
    %c0_i32_0 = arith.constant 0 : i32
    %c0_i32_1 = arith.constant 0 : i32
    return %c0_i32, %c0_i32_0 : i32, i32
  }
  func.func @transform_6(%arg0: i32) -> (i32, i32) {
    %c0_i32 = arith.constant 0 : i32
    %c0_i32_0 = arith.constant 0 : i32
    %c0_i32_1 = arith.constant 0 : i32
    return %c0_i32, %c0_i32_0 : i32, i32
  }
}

</mosaic_0001>

<llo_original>
// kernel: tpu_custom_call.1
$region0: #{tpu_custom_call.1}
  #allocation0 [shape = 'u32[]', space=smem, size = 0x4, offset = 0x4, fixed_abs, tag = 'smem constant byte address 0x4 - core index']
  #allocation1 [shape = 'u32[144,128]{1,0:T(1,128)}', space=vmem, size = 0x12000, scoped, tag = 'internal scratch']
  %s0 = inlined_call_operand.vmem [shape: f32[16,32], index: 0, kind: input, shape index: {}]
  %s1 = inlined_call_operand.vmem [shape: f32[4,128], index: 1, kind: input, shape index: {}]
  %s2 = inlined_call_operand.vmem [shape: f32[32,96], index: 2, kind: input, shape index: {}]
  %s3 = inlined_call_operand.vmem [shape: f32[32,32], index: 3, kind: input, shape index: {}]
  %s4 = inlined_call_operand.vmem [shape: f32[32,128], index: 4, kind: input, shape index: {}]
  %s5 = inlined_call_operand.vmem [shape: f32[128,32], index: 5, kind: input, shape index: {}]
  %s6 = inlined_call_operand.hbm [shape: f32[16,32], index: 6, kind: output, shape index: {}]
  %s7 = sld [smem:[#allocation0]]
  $region34: #{tpu_custom_call.1} parent=0
    _
  %s9 = ssub.s32 1, %s7
  %s10 = scalar_select 0, %s9, %s7
  $region1: #{tpu_custom_call.1} parent=0
    #allocation2 [shape = 'u8[8192]{0}', space=vmem, size = 0x2000, scoped, tag = 'output window, operand 0, single buffered']
    #allocation3 [shape = 's32[1]{0}', space=sflag, size = 0x4, scoped, tag = 'scoped memory for tpu_custom_call.1']
    %11 = vsyncpa [#allocation3], 0
    // Predicated region
    $region2: #{tpu_custom_call.1} parent=1 // pred_check
      _
    $region3: #{tpu_custom_call.1} parent=1 // pred_check_branch
      %13 = sbr.rel (0) target = $region5
    $region4: #{tpu_custom_call.1} parent=1 // pred_region
      _
    $region5: #{tpu_custom_call.1} parent=1 // pred_fallthru
      _
    // Predicated region
    $region6: #{tpu_custom_call.1} parent=1 // pred_check
      _
    $region7: #{tpu_custom_call.1} parent=1 // pred_check_branch
      %15 = sbr.rel (0) target = $region9
    $region8: #{tpu_custom_call.1} parent=1 // pred_region
      _
    $region9: #{tpu_custom_call.1} parent=1 // pred_fallthru
      _
    // Predicated region
    $region10: #{tpu_custom_call.1} parent=1 // pred_check
      _
    $region11: #{tpu_custom_call.1} parent=1 // pred_check_branch
      %17 = sbr.rel (0) target = $region13
    $region12: #{tpu_custom_call.1} parent=1 // pred_region
      _
    $region13: #{tpu_custom_call.1} parent=1 // pred_fallthru
      _
    // Predicated region
    $region14: #{tpu_custom_call.1} parent=1 // pred_check
      _
    $region15: #{tpu_custom_call.1} parent=1 // pred_check_branch
      %19 = sbr.rel (0) target = $region17
    $region16: #{tpu_custom_call.1} parent=1 // pred_region
      _
    $region17: #{tpu_custom_call.1} parent=1 // pred_fallthru
      _
    // Predicated region
    $region18: #{tpu_custom_call.1} parent=1 // pred_check
      _
    $region19: #{tpu_custom_call.1} parent=1 // pred_check_branch
      %21 = sbr.rel (0) target = $region21
    $region20: #{tpu_custom_call.1} parent=1 // pred_region
      _
    $region21: #{tpu_custom_call.1} parent=1 // pred_fallthru
      _
    // Predicated region
    $region22: #{tpu_custom_call.1} parent=1 // pred_check
      _
    $region23: #{tpu_custom_call.1} parent=1 // pred_check_branch
      %23 = sbr.rel (0) target = $region25
    $region24: #{tpu_custom_call.1} parent=1 // pred_region
      _
    $region25: #{tpu_custom_call.1} parent=1 // pred_fallthru
      _
    %v24 = vld [vmem:[%s0] sm:$0xff]
    %v25 = vld [vmem:[%s0 + $0x8] sm:$0xff]
    %vm26 = vcmask 261120
    %v27 = vsel %vm26, %v24, 0.0
    %28 = vadd.xlane.f32.xlu0 %v27
    %v29 = vpop.xlane.xlu0 %28
    %v30 = vsel %vm26, %v25, 0.0
    %31 = vadd.xlane.f32.xlu0 %v30
    %v32 = vpop.xlane.xlu0 %31
    %v33 = vrcp.pop 32.0
    %v34 = vmul.f32 %v29, %v33
    %v35 = vmul.f32 %v32, %v33
    %v36 = vsub.f32 %v24, %v34
    %v37 = vsub.f32 %v25, %v35
    %v38 = vmul.f32 %v36, %v36
    %v39 = vmul.f32 %v37, %v37
    %v40 = vsel %vm26, %v38, 0.0
    %41 = vadd.xlane.f32.xlu0 %v40
    %v42 = vpop.xlane.xlu0 %41
    %v43 = vsel %vm26, %v39, 0.0
    %44 = vadd.xlane.f32.xlu0 %v43
    %v45 = vpop.xlane.xlu0 %44
    %v46 = vmul.f32 %v42, %v33
    %v47 = vmul.f32 %v45, %v33
    %v48 = vadd.f32 %v46, 1e-05
    %v49 = vadd.f32 %v47, 1e-05
    %v50 = vrsqrt.pop %v48
    %v51 = vrsqrt.pop %v49
    %v52 = vmul.f32 %v36, %v50
    %v53 = vmul.f32 %v37, %v51
    %v54 = vld [vmem:[%s2] sm:$0xff]
    %v55 = vld [vmem:[%s2 + $0x8] sm:$0xff]
    %v56 = vld [vmem:[%s2 + $0x10] sm:$0xff]
    %v57 = vld [vmem:[%s2 + $0x18] sm:$0xff]
    %v58 = vld [vmem:[%s1] sm:$0x1]
    %v59 = vlaneseq
    %v60 = vshrl.u32 %v59, 7
    %v61 = vsub.s32 0, %v60
    %v62 = vrot.slane %v58, %v61
    %v64 = vsel %vm26, %v52, 0
    %v67 = vsel %vm26, %v53, 0
    %69 = vmatprep.subr.mxu0 0.0
    %70 = vmatpush1.msra.mxu0 %v54
    %71 = vmatprep.subr.mxu0 0.0
    %72 = vmatpush1.msra.mxu0 %v55
    %73 = vmatprep.subr.mxu0 0.0
    %74 = vmatpush1.msra.mxu0 %v56
    %75 = vmatprep.subr.mxu0 0.0
    %76 = vmatpush1.msra.mxu0 %v57
    %77 = vmatprep.subr.mxu0 0.0
    %78 = vmatpush1.msra.mxu0 0.0
    %79 = vmatprep.subr.mxu0 0.0
    %80 = vmatpush1.msra.mxu0 0.0
    %81 = vmatprep.subr.mxu0 0.0
    %82 = vmatpush1.msra.mxu0 0.0
    %83 = vmatprep.subr.mxu0 0.0
    %84 = vmatpush1.msra.mxu0 0.0
    %85 = vmatprep.subr.mxu0 0.0
    %86 = vmatpush1.msra.mxu0 0.0
    %87 = vmatprep.subr.mxu0 0.0
    %88 = vmatpush1.msra.mxu0 0.0
    %89 = vmatprep.subr.mxu0 0.0
    %90 = vmatpush1.msra.mxu0 0.0
    %91 = vmatprep.subr.mxu0 0.0
    %92 = vmatpush1.msra.mxu0 0.0
    %93 = vmatprep.subr.mxu0 0.0
    %94 = vmatpush1.msra.mxu0 0.0
    %95 = vmatprep.subr.mxu0 0.0
    %96 = vmatpush1.msra.mxu0 0.0
    %97 = vmatprep.subr.mxu0 0.0
    %98 = vmatpush1.msra.mxu0 0.0
    %99 = vmatprep.subr.mxu0 0.0
    %100 = vmatpush1.msra.mxu0 0.0
    %101 = vmatprep.subr.mxu0 0.0
    %102 = vmatpush1.msra.mxu0 0.0
    %103 = vmatprep.subr.mxu0 0.0
    %104 = vmatpush1.msra.mxu0 0.0
    %105 = vmatprep.subr.mxu0 0.0
    %106 = vmatpush1.msra.mxu0 0.0
    %107 = vmatprep.subr.mxu0 0.0
    %108 = vmatpush1.msra.mxu0 0.0
    %109 = vmatprep.subr.mxu0 0.0
    %110 = vmatpush1.msra.mxu0 0.0
    %111 = vmatprep.subr.mxu0 0.0
    %112 = vmatpush1.msra.mxu0 0.0
    %113 = vmatprep.subr.mxu0 0.0
    %114 = vmatpush1.msra.mxu0 0.0
    %115 = vmatprep.subr.mxu0 0.0
    %116 = vmatpush1.msra.mxu0 0.0
    %117 = vmatprep.subr.mxu0 0.0
    %118 = vmatpush1.msra.mxu0 0.0
    %119 = vmatprep.subr.mxu0 0.0
    %120 = vmatpush1.msra.mxu0 0.0
    %121 = vmatprep.subr.mxu0 0.0
    %122 = vmatpush1.msra.mxu0 0.0
    %123 = vmatprep.subr.mxu0 0.0
    %124 = vmatpush1.msra.mxu0 0.0
    %125 = vmatprep.subr.mxu0 0.0
    %126 = vmatpush1.msra.mxu0 0.0
    %127 = vmatprep.subr.mxu0 0.0
    %128 = vmatpush1.msra.mxu0 0.0
    %129 = vmatprep.subr.mxu0 0.0
    %130 = vmatpush1.msra.mxu0 0.0
    %131 = vmatprep.subr.mxu0 0.0
    %132 = vmatpush1.msra.mxu0 0.0
    %133 = vmatprep.mubr.f32.mxu0 0.0
    %134 = vmatmul.mubr.f32.gmra.mrb[0].mxu0 %v64
    %v135 = vpop.f32.mrb[0].mxu0
    %v136 = vadd.f32 %v62, %v135
    %v137 = vpop.f32.mrb[0].mxu0
    %138 = vmatprep.mubr.f32.mxu0 0.0
    %139 = vmatmul.mubr.f32.gmra.mrb[0].mxu0 %v67
    %v140 = vpop.f32.mrb[0].mxu0
    %v141 = vadd.f32 %v62, %v140
    %v142 = vpop.f32.mrb[0].mxu0
    %143 = vdwg.mxu0
    %146 = vrot.lane.b32.xlu0 %v136, 120
    %v147 = vpop.permute.xlu0 %146
    %148 = vrot.lane.b32.xlu0 %v141, 120
    %v149 = vpop.permute.xlu0 %148
    %152 = vrot.lane.b32.xlu0 %v136, 112
    %v153 = vpop.permute.xlu0 %152
    %154 = vrot.lane.b32.xlu0 %v141, 112
    %v155 = vpop.permute.xlu0 %154
    %158 = vrot.lane.b32.xlu0 %v136, 104
    %v159 = vpop.permute.xlu0 %158
    %160 = vrot.lane.b32.xlu0 %v141, 104
    %v161 = vpop.permute.xlu0 %160
    %v164 = vcombine.low %v136, %v153
    %v165 = vcombine.high %v136, %v153
    %v167 = vunpack.c.l.s4 1983009808
    %v168 = vunpack.c.0.s8 %v167
    %v169 = vlaneseq
    %v170 = vshrl.u32 %v169, 7
    %v171 = vsub.s32 %v168, %v170
    %v172 = vrot.slane %v164, %v171
    %v174 = vunpack.c.l.s4 1983009808
    %v175 = vunpack.c.0.s8 %v174
    %v176 = vlaneseq
    %v177 = vshrl.u32 %v176, 7
    %v178 = vsub.s32 %v175, %v177
    %v179 = vrot.slane %v165, %v178
    %v180 = vcombine.low %v147, %v159
    %v181 = vcombine.high %v147, %v159
    %v183 = vunpack.c.l.s4 1983009808
    %v184 = vunpack.c.0.s8 %v183
    %v185 = vlaneseq
    %v186 = vshrl.u32 %v185, 7
    %v187 = vsub.s32 %v184, %v186
    %v188 = vrot.slane %v180, %v187
    %v190 = vunpack.c.l.s4 1983009808
    %v191 = vunpack.c.0.s8 %v190
    %v192 = vlaneseq
    %v193 = vshrl.u32 %v192, 7
    %v194 = vsub.s32 %v191, %v193
    %v195 = vrot.slane %v181, %v194
    %v196 = vcombine.low %v172, %v188
    %v197 = vcombine.high %v172, %v188
    %v199 = vunpack.c.l.s4 1934713408
    %v200 = vunpack.c.0.s8 %v199
    %v201 = vlaneseq
    %v202 = vshrl.u32 %v201, 7
    %v203 = vsub.s32 %v200, %v202
    %v204 = vrot.slane %v196, %v203
    %v206 = vunpack.c.l.s4 1934713408
    %v207 = vunpack.c.0.s8 %v206
    %v208 = vlaneseq
    %v209 = vshrl.u32 %v208, 7
    %v210 = vsub.s32 %v207, %v209
    %v211 = vrot.slane %v197, %v210
    %v212 = vcombine.low %v179, %v195
    %v213 = vcombine.high %v179, %v195
    %v215 = vunpack.c.l.s4 1934713408
    %v216 = vunpack.c.0.s8 %v215
    %v217 = vlaneseq
    %v218 = vshrl.u32 %v217, 7
    %v219 = vsub.s32 %v216, %v218
    %v220 = vrot.slane %v212, %v219
    %v222 = vunpack.c.l.s4 1934713408
    %v223 = vunpack.c.0.s8 %v222
    %v224 = vlaneseq
    %v225 = vshrl.u32 %v224, 7
    %v226 = vsub.s32 %v223, %v225
    %v227 = vrot.slane %v213, %v226
    %v228 = vcombine.high %v204, 0.0
    %v229 = vcombine.high %v211, 0.0
    %v230 = vcombine.high %v220, 0.0
    %v231 = vcombine.high %v227, 0.0
    %v232 = vcombine.low %v141, %v155
    %v233 = vcombine.high %v141, %v155
    %v235 = vunpack.c.l.s4 1983009808
    %v236 = vunpack.c.0.s8 %v235
    %v237 = vlaneseq
    %v238 = vshrl.u32 %v237, 7
    %v239 = vsub.s32 %v236, %v238
    %v240 = vrot.slane %v232, %v239
    %v242 = vunpack.c.l.s4 1983009808
    %v243 = vunpack.c.0.s8 %v242
    %v244 = vlaneseq
    %v245 = vshrl.u32 %v244, 7
    %v246 = vsub.s32 %v243, %v245
    %v247 = vrot.slane %v233, %v246
    %v248 = vcombine.low %v149, %v161
    %v249 = vcombine.high %v149, %v161
    %v251 = vunpack.c.l.s4 1983009808
    %v252 = vunpack.c.0.s8 %v251
    %v253 = vlaneseq
    %v254 = vshrl.u32 %v253, 7
    %v255 = vsub.s32 %v252, %v254
    %v256 = vrot.slane %v248, %v255
    %v258 = vunpack.c.l.s4 1983009808
    %v259 = vunpack.c.0.s8 %v258
    %v260 = vlaneseq
    %v261 = vshrl.u32 %v260, 7
    %v262 = vsub.s32 %v259, %v261
    %v263 = vrot.slane %v249, %v262
    %v264 = vcombine.low %v240, %v256
    %v265 = vcombine.high %v240, %v256
    %v267 = vunpack.c.l.s4 1934713408
    %v268 = vunpack.c.0.s8 %v267
    %v269 = vlaneseq
    %v270 = vshrl.u32 %v269, 7
    %v271 = vsub.s32 %v268, %v270
    %v272 = vrot.slane %v264, %v271
    %v274 = vunpack.c.l.s4 1934713408
    %v275 = vunpack.c.0.s8 %v274
    %v276 = vlaneseq
    %v277 = vshrl.u32 %v276, 7
    %v278 = vsub.s32 %v275, %v277
    %v279 = vrot.slane %v265, %v278
    %v280 = vcombine.low %v247, %v263
    %v281 = vcombine.high %v247, %v263
    %v283 = vunpack.c.l.s4 1934713408
    %v284 = vunpack.c.0.s8 %v283
    %v285 = vlaneseq
    %v286 = vshrl.u32 %v285, 7
    %v287 = vsub.s32 %v284, %v286
    %v288 = vrot.slane %v280, %v287
    %v290 = vunpack.c.l.s4 1934713408
    %v291 = vunpack.c.0.s8 %v290
    %v292 = vlaneseq
    %v293 = vshrl.u32 %v292, 7
    %v294 = vsub.s32 %v291, %v293
    %v295 = vrot.slane %v281, %v294
    %v296 = vcombine.high %v272, 0.0
    %v297 = vcombine.high %v279, 0.0
    %v298 = vcombine.high %v288, 0.0
    %v299 = vcombine.high %v295, 0.0
    %v300 = vcombine.low %v204, %v211
    %v302 = vunpack.c.l.s4 1983009808
    %v303 = vunpack.c.0.s8 %v302
    %v304 = vlaneseq
    %v305 = vshrl.u32 %v304, 7
    %v306 = vsub.s32 %v303, %v305
    %v307 = vrot.slane %v300, %v306
    %v308 = vcombine.low %v228, %v229
    %v310 = vunpack.c.l.s4 1983009808
    %v311 = vunpack.c.0.s8 %v310
    %v312 = vlaneseq
    %v313 = vshrl.u32 %v312, 7
    %v314 = vsub.s32 %v311, %v313
    %v315 = vrot.slane %v308, %v314
    %v316 = vcombine.low %v220, %v227
    %v318 = vunpack.c.l.s4 1983009808
    %v319 = vunpack.c.0.s8 %v318
    %v320 = vlaneseq
    %v321 = vshrl.u32 %v320, 7
    %v322 = vsub.s32 %v319, %v321
    %v323 = vrot.slane %v316, %v322
    %v324 = vcombine.low %v230, %v231
    %v326 = vunpack.c.l.s4 1983009808
    %v327 = vunpack.c.0.s8 %v326
    %v328 = vlaneseq
    %v329 = vshrl.u32 %v328, 7
    %v330 = vsub.s32 %v327, %v329
    %v331 = vrot.slane %v324, %v330
    %v332 = vcombine.low %v307, %v315
    %v333 = vcombine.high %v307, %v315
    %v335 = vunpack.c.l.s4 1934713408
    %v336 = vunpack.c.0.s8 %v335
    %v337 = vlaneseq
    %v338 = vshrl.u32 %v337, 7
    %v339 = vsub.s32 %v336, %v338
    %v340 = vrot.slane %v332, %v339
    %v342 = vunpack.c.l.s4 1934713408
    %v343 = vunpack.c.0.s8 %v342
    %v344 = vlaneseq
    %v345 = vshrl.u32 %v344, 7
    %v346 = vsub.s32 %v343, %v345
    %v347 = vrot.slane %v333, %v346
    %v348 = vcombine.low %v323, %v331
    %v349 = vcombine.high %v323, %v331
    %v351 = vunpack.c.l.s4 1934713408
    %v352 = vunpack.c.0.s8 %v351
    %v353 = vlaneseq
    %v354 = vshrl.u32 %v353, 7
    %v355 = vsub.s32 %v352, %v354
    %v356 = vrot.slane %v348, %v355
    %v358 = vunpack.c.l.s4 1934713408
    %v359 = vunpack.c.0.s8 %v358
    %v360 = vlaneseq
    %v361 = vshrl.u32 %v360, 7
    %v362 = vsub.s32 %v359, %v361
    %v363 = vrot.slane %v349, %v362
    %v364 = vcombine.low %v340, %v356
    %v365 = vcombine.high %v340, %v356
    %v366 = vcombine.low %v347, %v363
    %v367 = vcombine.high %v347, %v363
    %v368 = vcombine.low %v272, %v279
    %v370 = vunpack.c.l.s4 1983009808
    %v371 = vunpack.c.0.s8 %v370
    %v372 = vlaneseq
    %v373 = vshrl.u32 %v372, 7
    %v374 = vsub.s32 %v371, %v373
    %v375 = vrot.slane %v368, %v374
    %v376 = vcombine.low %v296, %v297
    %v378 = vunpack.c.l.s4 1983009808
    %v379 = vunpack.c.0.s8 %v378
    %v380 = vlaneseq
    %v381 = vshrl.u32 %v380, 7
    %v382 = vsub.s32 %v379, %v381
    %v383 = vrot.slane %v376, %v382
    %v384 = vcombine.low %v288, %v295
    %v386 = vunpack.c.l.s4 1983009808
    %v387 = vunpack.c.0.s8 %v386
    %v388 = vlaneseq
    %v389 = vshrl.u32 %v388, 7
    %v390 = vsub.s32 %v387, %v389
    %v391 = vrot.slane %v384, %v390
    %v392 = vcombine.low %v298, %v299
    %v394 = vunpack.c.l.s4 1983009808
    %v395 = vunpack.c.0.s8 %v394
    %v396 = vlaneseq
    %v397 = vshrl.u32 %v396, 7
    %v398 = vsub.s32 %v395, %v397
    %v399 = vrot.slane %v392, %v398
    %v400 = vcombine.low %v375, %v383
    %v401 = vcombine.high %v375, %v383
    %v403 = vunpack.c.l.s4 1934713408
    %v404 = vunpack.c.0.s8 %v403
    %v405 = vlaneseq
    %v406 = vshrl.u32 %v405, 7
    %v407 = vsub.s32 %v404, %v406
    %v408 = vrot.slane %v400, %v407
    %v410 = vunpack.c.l.s4 1934713408
    %v411 = vunpack.c.0.s8 %v410
    %v412 = vlaneseq
    %v413 = vshrl.u32 %v412, 7
    %v414 = vsub.s32 %v411, %v413
    %v415 = vrot.slane %v401, %v414
    %v416 = vcombine.low %v391, %v399
    %v417 = vcombine.high %v391, %v399
    %v419 = vunpack.c.l.s4 1934713408
    %v420 = vunpack.c.0.s8 %v419
    %v421 = vlaneseq
    %v422 = vshrl.u32 %v421, 7
    %v423 = vsub.s32 %v420, %v422
    %v424 = vrot.slane %v416, %v423
    %v426 = vunpack.c.l.s4 1934713408
    %v427 = vunpack.c.0.s8 %v426
    %v428 = vlaneseq
    %v429 = vshrl.u32 %v428, 7
    %v430 = vsub.s32 %v427, %v429
    %v431 = vrot.slane %v417, %v430
    %v432 = vcombine.low %v408, %v424
    %v433 = vcombine.high %v408, %v424
    %v434 = vcombine.low %v415, %v431
    %v435 = vcombine.high %v415, %v431
    %436 = vrot.lane.b32.xlu0 %v136, 96
    %v437 = vpop.permute.xlu0 %436
    %438 = vrot.lane.b32.xlu0 %v141, 96
    %v439 = vpop.permute.xlu0 %438
    %440 = vrot.lane.b32.xlu0 %v147, 96
    %v441 = vpop.permute.xlu0 %440
    %442 = vrot.lane.b32.xlu0 %v149, 96
    %v443 = vpop.permute.xlu0 %442
    %444 = vrot.lane.b32.xlu0 %v153, 96
    %v445 = vpop.permute.xlu0 %444
    %446 = vrot.lane.b32.xlu0 %v155, 96
    %v447 = vpop.permute.xlu0 %446
    %448 = vrot.lane.b32.xlu0 %v159, 96
    %v449 = vpop.permute.xlu0 %448
    %450 = vrot.lane.b32.xlu0 %v161, 96
    %v451 = vpop.permute.xlu0 %450
    %v460 = vcombine.low %v437, %v445
    %v461 = vcombine.high %v437, %v445
    %v463 = vunpack.c.l.s4 1983009808
    %v464 = vunpack.c.0.s8 %v463
    %v465 = vlaneseq
    %v466 = vshrl.u32 %v465, 7
    %v467 = vsub.s32 %v464, %v466
    %v468 = vrot.slane %v460, %v467
    %v470 = vunpack.c.l.s4 1983009808
    %v471 = vunpack.c.0.s8 %v470
    %v472 = vlaneseq
    %v473 = vshrl.u32 %v472, 7
    %v474 = vsub.s32 %v471, %v473
    %v475 = vrot.slane %v461, %v474
    %v476 = vcombine.low %v441, %v449
    %v477 = vcombine.high %v441, %v449
    %v479 = vunpack.c.l.s4 1983009808
    %v480 = vunpack.c.0.s8 %v479
    %v481 = vlaneseq
    %v482 = vshrl.u32 %v481, 7
    %v483 = vsub.s32 %v480, %v482
    %v484 = vrot.slane %v476, %v483
    %v486 = vunpack.c.l.s4 1983009808
    %v487 = vunpack.c.0.s8 %v486
    %v488 = vlaneseq
    %v489 = vshrl.u32 %v488, 7
    %v490 = vsub.s32 %v487, %v489
    %v491 = vrot.slane %v477, %v490
    %v492 = vcombine.low %v468, %v484
    %v493 = vcombine.high %v468, %v484
    %v495 = vunpack.c.l.s4 1934713408
    %v496 = vunpack.c.0.s8 %v495
    %v497 = vlaneseq
    %v498 = vshrl.u32 %v497, 7
    %v499 = vsub.s32 %v496, %v498
    %v500 = vrot.slane %v492, %v499
    %v502 = vunpack.c.l.s4 1934713408
    %v503 = vunpack.c.0.s8 %v502
    %v504 = vlaneseq
    %v505 = vshrl.u32 %v504, 7
    %v506 = vsub.s32 %v503, %v505
    %v507 = vrot.slane %v493, %v506
    %v508 = vcombine.low %v475, %v491
    %v509 = vcombine.high %v475, %v491
    %v511 = vunpack.c.l.s4 1934713408
    %v512 = vunpack.c.0.s8 %v511
    %v513 = vlaneseq
    %v514 = vshrl.u32 %v513, 7
    %v515 = vsub.s32 %v512, %v514
    %v516 = vrot.slane %v508, %v515
    %v518 = vunpack.c.l.s4 1934713408
    %v519 = vunpack.c.0.s8 %v518
    %v520 = vlaneseq
    %v521 = vshrl.u32 %v520, 7
    %v522 = vsub.s32 %v519, %v521
    %v523 = vrot.slane %v509, %v522
    %v524 = vcombine.high %v500, 0.0
    %v525 = vcombine.high %v507, 0.0
    %v526 = vcombine.high %v516, 0.0
    %v527 = vcombine.high %v523, 0.0
    %v528 = vcombine.low %v439, %v447
    %v529 = vcombine.high %v439, %v447
    %v531 = vunpack.c.l.s4 1983009808
    %v532 = vunpack.c.0.s8 %v531
    %v533 = vlaneseq
    %v534 = vshrl.u32 %v533, 7
    %v535 = vsub.s32 %v532, %v534
    %v536 = vrot.slane %v528, %v535
    %v538 = vunpack.c.l.s4 1983009808
    %v539 = vunpack.c.0.s8 %v538
    %v540 = vlaneseq
    %v541 = vshrl.u32 %v540, 7
    %v542 = vsub.s32 %v539, %v541
    %v543 = vrot.slane %v529, %v542
    %v544 = vcombine.low %v443, %v451
    %v545 = vcombine.high %v443, %v451
    %v547 = vunpack.c.l.s4 1983009808
    %v548 = vunpack.c.0.s8 %v547
    %v549 = vlaneseq
    %v550 = vshrl.u32 %v549, 7
    %v551 = vsub.s32 %v548, %v550
    %v552 = vrot.slane %v544, %v551
    %v554 = vunpack.c.l.s4 1983009808
    %v555 = vunpack.c.0.s8 %v554
    %v556 = vlaneseq
    %v557 = vshrl.u32 %v556, 7
    %v558 = vsub.s32 %v555, %v557
    %v559 = vrot.slane %v545, %v558
    %v560 = vcombine.low %v536, %v552
    %v561 = vcombine.high %v536, %v552
    %v563 = vunpack.c.l.s4 1934713408
    %v564 = vunpack.c.0.s8 %v563
    %v565 = vlaneseq
    %v566 = vshrl.u32 %v565, 7
    %v567 = vsub.s32 %v564, %v566
    %v568 = vrot.slane %v560, %v567
    %v570 = vunpack.c.l.s4 1934713408
    %v571 = vunpack.c.0.s8 %v570
    %v572 = vlaneseq
    %v573 = vshrl.u32 %v572, 7
    %v574 = vsub.s32 %v571, %v573
    %v575 = vrot.slane %v561, %v574
    %v576 = vcombine.low %v543, %v559
    %v577 = vcombine.high %v543, %v559
    %v579 = vunpack.c.l.s4 1934713408
    %v580 = vunpack.c.0.s8 %v579
    %v581 = vlaneseq
    %v582 = vshrl.u32 %v581, 7
    %v583 = vsub.s32 %v580, %v582
    %v584 = vrot.slane %v576, %v583
    %v586 = vunpack.c.l.s4 1934713408
    %v587 = vunpack.c.0.s8 %v586
    %v588 = vlaneseq
    %v589 = vshrl.u32 %v588, 7
    %v590 = vsub.s32 %v587, %v589
    %v591 = vrot.slane %v577, %v590
    %v592 = vcombine.high %v568, 0.0
    %v593 = vcombine.high %v575, 0.0
    %v594 = vcombine.high %v584, 0.0
    %v595 = vcombine.high %v591, 0.0
    %v596 = vcombine.low %v500, %v507
    %v598 = vunpack.c.l.s4 1983009808
    %v599 = vunpack.c.0.s8 %v598
    %v600 = vlaneseq
    %v601 = vshrl.u32 %v600, 7
    %v602 = vsub.s32 %v599, %v601
    %v603 = vrot.slane %v596, %v602
    %v604 = vcombine.low %v524, %v525
    %v606 = vunpack.c.l.s4 1983009808
    %v607 = vunpack.c.0.s8 %v606
    %v608 = vlaneseq
    %v609 = vshrl.u32 %v608, 7
    %v610 = vsub.s32 %v607, %v609
    %v611 = vrot.slane %v604, %v610
    %v612 = vcombine.low %v516, %v523
    %v614 = vunpack.c.l.s4 1983009808
    %v615 = vunpack.c.0.s8 %v614
    %v616 = vlaneseq
    %v617 = vshrl.u32 %v616, 7
    %v618 = vsub.s32 %v615, %v617
    %v619 = vrot.slane %v612, %v618
    %v620 = vcombine.low %v526, %v527
    %v622 = vunpack.c.l.s4 1983009808
    %v623 = vunpack.c.0.s8 %v622
    %v624 = vlaneseq
    %v625 = vshrl.u32 %v624, 7
    %v626 = vsub.s32 %v623, %v625
    %v627 = vrot.slane %v620, %v626
    %v628 = vcombine.low %v603, %v611
    %v629 = vcombine.high %v603, %v611
    %v631 = vunpack.c.l.s4 1934713408
    %v632 = vunpack.c.0.s8 %v631
    %v633 = vlaneseq
    %v634 = vshrl.u32 %v633, 7
    %v635 = vsub.s32 %v632, %v634
    %v636 = vrot.slane %v628, %v635
    %v638 = vunpack.c.l.s4 1934713408
    %v639 = vunpack.c.0.s8 %v638
    %v640 = vlaneseq
    %v641 = vshrl.u32 %v640, 7
    %v642 = vsub.s32 %v639, %v641
    %v643 = vrot.slane %v629, %v642
    %v644 = vcombine.low %v619, %v627
    %v645 = vcombine.high %v619, %v627
    %v647 = vunpack.c.l.s4 1934713408
    %v648 = vunpack.c.0.s8 %v647
    %v649 = vlaneseq
    %v650 = vshrl.u32 %v649, 7
    %v651 = vsub.s32 %v648, %v650
    %v652 = vrot.slane %v644, %v651
    %v654 = vunpack.c.l.s4 1934713408
    %v655 = vunpack.c.0.s8 %v654
    %v656 = vlaneseq
    %v657 = vshrl.u32 %v656, 7
    %v658 = vsub.s32 %v655, %v657
    %v659 = vrot.slane %v645, %v658
    %v660 = vcombine.low %v636, %v652
    %v661 = vcombine.high %v636, %v652
    %v662 = vcombine.low %v643, %v659
    %v663 = vcombine.high %v643, %v659
    %v664 = vcombine.low %v568, %v575
    %v666 = vunpack.c.l.s4 1983009808
    %v667 = vunpack.c.0.s8 %v666
    %v668 = vlaneseq
    %v669 = vshrl.u32 %v668, 7
    %v670 = vsub.s32 %v667, %v669
    %v671 = vrot.slane %v664, %v670
    %v672 = vcombine.low %v592, %v593
    %v674 = vunpack.c.l.s4 1983009808
    %v675 = vunpack.c.0.s8 %v674
    %v676 = vlaneseq
    %v677 = vshrl.u32 %v676, 7
    %v678 = vsub.s32 %v675, %v677
    %v679 = vrot.slane %v672, %v678
    %v680 = vcombine.low %v584, %v591
    %v682 = vunpack.c.l.s4 1983009808
    %v683 = vunpack.c.0.s8 %v682
    %v684 = vlaneseq
    %v685 = vshrl.u32 %v684, 7
    %v686 = vsub.s32 %v683, %v685
    %v687 = vrot.slane %v680, %v686
    %v688 = vcombine.low %v594, %v595
    %v690 = vunpack.c.l.s4 1983009808
    %v691 = vunpack.c.0.s8 %v690
    %v692 = vlaneseq
    %v693 = vshrl.u32 %v692, 7
    %v694 = vsub.s32 %v691, %v693
    %v695 = vrot.slane %v688, %v694
    %v696 = vcombine.low %v671, %v679
    %v697 = vcombine.high %v671, %v679
    %v699 = vunpack.c.l.s4 1934713408
    %v700 = vunpack.c.0.s8 %v699
    %v701 = vlaneseq
    %v702 = vshrl.u32 %v701, 7
    %v703 = vsub.s32 %v700, %v702
    %v704 = vrot.slane %v696, %v703
    %v706 = vunpack.c.l.s4 1934713408
    %v707 = vunpack.c.0.s8 %v706
    %v708 = vlaneseq
    %v709 = vshrl.u32 %v708, 7
    %v710 = vsub.s32 %v707, %v709
    %v711 = vrot.slane %v697, %v710
    %v712 = vcombine.low %v687, %v695
    %v713 = vcombine.high %v687, %v695
    %v715 = vunpack.c.l.s4 1934713408
    %v716 = vunpack.c.0.s8 %v715
    %v717 = vlaneseq
    %v718 = vshrl.u32 %v717, 7
    %v719 = vsub.s32 %v716, %v718
    %v720 = vrot.slane %v712, %v719
    %v722 = vunpack.c.l.s4 1934713408
    %v723 = vunpack.c.0.s8 %v722
    %v724 = vlaneseq
    %v725 = vshrl.u32 %v724, 7
    %v726 = vsub.s32 %v723, %v725
    %v727 = vrot.slane %v713, %v726
    %v728 = vcombine.low %v704, %v720
    %v729 = vcombine.high %v704, %v720
    %v730 = vcombine.low %v711, %v727
    %v731 = vcombine.high %v711, %v727
    %732 = vrot.lane.b32.xlu0 %v136, 64
    %v733 = vpop.permute.xlu0 %732
    %734 = vrot.lane.b32.xlu0 %v141, 64
    %v735 = vpop.permute.xlu0 %734
    %736 = vrot.lane.b32.xlu0 %v147, 64
    %v737 = vpop.permute.xlu0 %736
    %738 = vrot.lane.b32.xlu0 %v149, 64
    %v739 = vpop.permute.xlu0 %738
    %740 = vrot.lane.b32.xlu0 %v153, 64
    %v741 = vpop.permute.xlu0 %740
    %742 = vrot.lane.b32.xlu0 %v155, 64
    %v743 = vpop.permute.xlu0 %742
    %744 = vrot.lane.b32.xlu0 %v159, 64
    %v745 = vpop.permute.xlu0 %744
    %746 = vrot.lane.b32.xlu0 %v161, 64
    %v747 = vpop.permute.xlu0 %746
    %v756 = vcombine.low %v733, %v741
    %v757 = vcombine.high %v733, %v741
    %v759 = vunpack.c.l.s4 1983009808
    %v760 = vunpack.c.0.s8 %v759
    %v761 = vlaneseq
    %v762 = vshrl.u32 %v761, 7
    %v763 = vsub.s32 %v760, %v762
    %v764 = vrot.slane %v756, %v763
    %v766 = vunpack.c.l.s4 1983009808
    %v767 = vunpack.c.0.s8 %v766
    %v768 = vlaneseq
    %v769 = vshrl.u32 %v768, 7
    %v770 = vsub.s32 %v767, %v769
    %v771 = vrot.slane %v757, %v770
    %v772 = vcombine.low %v737, %v745
    %v773 = vcombine.high %v737, %v745
    %v775 = vunpack.c.l.s4 1983009808
    %v776 = vunpack.c.0.s8 %v775
    %v777 = vlaneseq
    %v778 = vshrl.u32 %v777, 7
    %v779 = vsub.s32 %v776, %v778
    %v780 = vrot.slane %v772, %v779
    %v782 = vunpack.c.l.s4 1983009808
    %v783 = vunpack.c.0.s8 %v782
    %v784 = vlaneseq
    %v785 = vshrl.u32 %v784, 7
    %v786 = vsub.s32 %v783, %v785
    %v787 = vrot.slane %v773, %v786
    %v788 = vcombine.low %v764, %v780
    %v789 = vcombine.high %v764, %v780
    %v791 = vunpack.c.l.s4 1934713408
    %v792 = vunpack.c.0.s8 %v791
    %v793 = vlaneseq
    %v794 = vshrl.u32 %v793, 7
    %v795 = vsub.s32 %v792, %v794
    %v796 = vrot.slane %v788, %v795
    %v798 = vunpack.c.l.s4 1934713408
    %v799 = vunpack.c.0.s8 %v798
    %v800 = vlaneseq
    %v801 = vshrl.u32 %v800, 7
    %v802 = vsub.s32 %v799, %v801
    %v803 = vrot.slane %v789, %v802
    %v804 = vcombine.low %v771, %v787
    %v805 = vcombine.high %v771, %v787
    %v807 = vunpack.c.l.s4 1934713408
    %v808 = vunpack.c.0.s8 %v807
    %v809 = vlaneseq
    %v810 = vshrl.u32 %v809, 7
    %v811 = vsub.s32 %v808, %v810
    %v812 = vrot.slane %v804, %v811
    %v814 = vunpack.c.l.s4 1934713408
    %v815 = vunpack.c.0.s8 %v814
    %v816 = vlaneseq
    %v817 = vshrl.u32 %v816, 7
    %v818 = vsub.s32 %v815, %v817
    %v819 = vrot.slane %v805, %v818
    %v820 = vcombine.high %v796, 0.0
    %v821 = vcombine.high %v803, 0.0
    %v822 = vcombine.high %v812, 0.0
    %v823 = vcombine.high %v819, 0.0
    %v824 = vcombine.low %v735, %v743
    %v825 = vcombine.high %v735, %v743
    %v827 = vunpack.c.l.s4 1983009808
    %v828 = vunpack.c.0.s8 %v827
    %v829 = vlaneseq
    %v830 = vshrl.u32 %v829, 7
    %v831 = vsub.s32 %v828, %v830
    %v832 = vrot.slane %v824, %v831
    %v834 = vunpack.c.l.s4 1983009808
    %v835 = vunpack.c.0.s8 %v834
    %v836 = vlaneseq
    %v837 = vshrl.u32 %v836, 7
    %v838 = vsub.s32 %v835, %v837
    %v839 = vrot.slane %v825, %v838
    %v840 = vcombine.low %v739, %v747
    %v841 = vcombine.high %v739, %v747
    %v843 = vunpack.c.l.s4 1983009808
    %v844 = vunpack.c.0.s8 %v843
    %v845 = vlaneseq
    %v846 = vshrl.u32 %v845, 7
    %v847 = vsub.s32 %v844, %v846
    %v848 = vrot.slane %v840, %v847
    %v850 = vunpack.c.l.s4 1983009808
    %v851 = vunpack.c.0.s8 %v850
    %v852 = vlaneseq
    %v853 = vshrl.u32 %v852, 7
    %v854 = vsub.s32 %v851, %v853
    %v855 = vrot.slane %v841, %v854
    %v856 = vcombine.low %v832, %v848
    %v857 = vcombine.high %v832, %v848
    %v859 = vunpack.c.l.s4 1934713408
    %v860 = vunpack.c.0.s8 %v859
    %v861 = vlaneseq
    %v862 = vshrl.u32 %v861, 7
    %v863 = vsub.s32 %v860, %v862
    %v864 = vrot.slane %v856, %v863
    %v866 = vunpack.c.l.s4 1934713408
    %v867 = vunpack.c.0.s8 %v866
    %v868 = vlaneseq
    %v869 = vshrl.u32 %v868, 7
    %v870 = vsub.s32 %v867, %v869
    %v871 = vrot.slane %v857, %v870
    %v872 = vcombine.low %v839, %v855
    %v873 = vcombine.high %v839, %v855
    %v875 = vunpack.c.l.s4 1934713408
    %v876 = vunpack.c.0.s8 %v875
    %v877 = vlaneseq
    %v878 = vshrl.u32 %v877, 7
    %v879 = vsub.s32 %v876, %v878
    %v880 = vrot.slane %v872, %v879
    %v882 = vunpack.c.l.s4 1934713408
    %v883 = vunpack.c.0.s8 %v882
    %v884 = vlaneseq
    %v885 = vshrl.u32 %v884, 7
    %v886 = vsub.s32 %v883, %v885
    %v887 = vrot.slane %v873, %v886
    %v888 = vcombine.high %v864, 0.0
    %v889 = vcombine.high %v871, 0.0
    %v890 = vcombine.high %v880, 0.0
    %v891 = vcombine.high %v887, 0.0
    %v892 = vcombine.low %v796, %v803
    %v894 = vunpack.c.l.s4 1983009808
    %v895 = vunpack.c.0.s8 %v894
    %v896 = vlaneseq
    %v897 = vshrl.u32 %v896, 7
    %v898 = vsub.s32 %v895, %v897
    %v899 = vrot.slane %v892, %v898
    %v900 = vcombine.low %v820, %v821
    %v902 = vunpack.c.l.s4 1983009808
    %v903 = vunpack.c.0.s8 %v902
    %v904 = vlaneseq
    %v905 = vshrl.u32 %v904, 7
    %v906 = vsub.s32 %v903, %v905
    %v907 = vrot.slane %v900, %v906
    %v908 = vcombine.low %v812, %v819
    %v910 = vunpack.c.l.s4 1983009808
    %v911 = vunpack.c.0.s8 %v910
    %v912 = vlaneseq
    %v913 = vshrl.u32 %v912, 7
    %v914 = vsub.s32 %v911, %v913
    %v915 = vrot.slane %v908, %v914
    %v916 = vcombine.low %v822, %v823
    %v918 = vunpack.c.l.s4 1983009808
    %v919 = vunpack.c.0.s8 %v918
    %v920 = vlaneseq
    %v921 = vshrl.u32 %v920, 7
    %v922 = vsub.s32 %v919, %v921
    %v923 = vrot.slane %v916, %v922
    %v924 = vcombine.low %v899, %v907
    %v925 = vcombine.high %v899, %v907
    %v927 = vunpack.c.l.s4 1934713408
    %v928 = vunpack.c.0.s8 %v927
    %v929 = vlaneseq
    %v930 = vshrl.u32 %v929, 7
    %v931 = vsub.s32 %v928, %v930
    %v932 = vrot.slane %v924, %v931
    %v934 = vunpack.c.l.s4 1934713408
    %v935 = vunpack.c.0.s8 %v934
    %v936 = vlaneseq
    %v937 = vshrl.u32 %v936, 7
    %v938 = vsub.s32 %v935, %v937
    %v939 = vrot.slane %v925, %v938
    %v940 = vcombine.low %v915, %v923
    %v941 = vcombine.high %v915, %v923
    %v943 = vunpack.c.l.s4 1934713408
    %v944 = vunpack.c.0.s8 %v943
    %v945 = vlaneseq
    %v946 = vshrl.u32 %v945, 7
    %v947 = vsub.s32 %v944, %v946
    %v948 = vrot.slane %v940, %v947
    %v950 = vunpack.c.l.s4 1934713408
    %v951 = vunpack.c.0.s8 %v950
    %v952 = vlaneseq
    %v953 = vshrl.u32 %v952, 7
    %v954 = vsub.s32 %v951, %v953
    %v955 = vrot.slane %v941, %v954
    %v956 = vcombine.low %v932, %v948
    %v957 = vcombine.high %v932, %v948
    %v958 = vcombine.low %v939, %v955
    %v959 = vcombine.high %v939, %v955
    %v960 = vcombine.low %v864, %v871
    %v962 = vunpack.c.l.s4 1983009808
    %v963 = vunpack.c.0.s8 %v962
    %v964 = vlaneseq
    %v965 = vshrl.u32 %v964, 7
    %v966 = vsub.s32 %v963, %v965
    %v967 = vrot.slane %v960, %v966
    %v968 = vcombine.low %v888, %v889
    %v970 = vunpack.c.l.s4 1983009808
    %v971 = vunpack.c.0.s8 %v970
    %v972 = vlaneseq
    %v973 = vshrl.u32 %v972, 7
    %v974 = vsub.s32 %v971, %v973
    %v975 = vrot.slane %v968, %v974
    %v976 = vcombine.low %v880, %v887
    %v978 = vunpack.c.l.s4 1983009808
    %v979 = vunpack.c.0.s8 %v978
    %v980 = vlaneseq
    %v981 = vshrl.u32 %v980, 7
    %v982 = vsub.s32 %v979, %v981
    %v983 = vrot.slane %v976, %v982
    %v984 = vcombine.low %v890, %v891
    %v986 = vunpack.c.l.s4 1983009808
    %v987 = vunpack.c.0.s8 %v986
    %v988 = vlaneseq
    %v989 = vshrl.u32 %v988, 7
    %v990 = vsub.s32 %v987, %v989
    %v991 = vrot.slane %v984, %v990
    %v992 = vcombine.low %v967, %v975
    %v993 = vcombine.high %v967, %v975
    %v995 = vunpack.c.l.s4 1934713408
    %v996 = vunpack.c.0.s8 %v995
    %v997 = vlaneseq
    %v998 = vshrl.u32 %v997, 7
    %v999 = vsub.s32 %v996, %v998
    %v1000 = vrot.slane %v992, %v999
    %v1002 = vunpack.c.l.s4 1934713408
    %v1003 = vunpack.c.0.s8 %v1002
    %v1004 = vlaneseq
    %v1005 = vshrl.u32 %v1004, 7
    %v1006 = vsub.s32 %v1003, %v1005
    %v1007 = vrot.slane %v993, %v1006
    %v1008 = vcombine.low %v983, %v991
    %v1009 = vcombine.high %v983, %v991
    %v1011 = vunpack.c.l.s4 1934713408
    %v1012 = vunpack.c.0.s8 %v1011
    %v1013 = vlaneseq
    %v1014 = vshrl.u32 %v1013, 7
    %v1015 = vsub.s32 %v1012, %v1014
    %v1016 = vrot.slane %v1008, %v1015
    %v1018 = vunpack.c.l.s4 1934713408
    %v1019 = vunpack.c.0.s8 %v1018
    %v1020 = vlaneseq
    %v1021 = vshrl.u32 %v1020, 7
    %v1022 = vsub.s32 %v1019, %v1021
    %v1023 = vrot.slane %v1009, %v1022
    %v1024 = vcombine.low %v1000, %v1016
    %v1025 = vcombine.high %v1000, %v1016
    %v1026 = vcombine.low %v1007, %v1023
    %v1027 = vcombine.high %v1007, %v1023
    %vm1028 = vcmask 64512
    %v1030 = vsel %vm1028, %v364, 0
    %v1033 = vsel %vm1028, %v660, 0
    %1035 = vmatprep.subr.mxu0 0.0
    %1036 = vmatpush1.xpose.msra.mxu0 %v1033
    %1037 = vmatprep.subr.mxu0 0.0
    %1038 = vmatpush1.xpose.msra.mxu0 0.0
    %1039 = vmatprep.subr.mxu0 0.0
    %1040 = vmatpush1.xpose.msra.mxu0 0.0
    %1041 = vmatprep.subr.mxu0 0.0
    %1042 = vmatpush1.xpose.msra.mxu0 0.0
    %1043 = vmatprep.subr.mxu0 0.0
    %1044 = vmatpush1.xpose.msra.mxu0 0.0
    %1045 = vmatprep.subr.mxu0 0.0
    %1046 = vmatpush1.xpose.msra.mxu0 0.0
    %1047 = vmatprep.subr.mxu0 0.0
    %1048 = vmatpush1.xpose.msra.mxu0 0.0
    %1049 = vmatprep.subr.mxu0 0.0
    %1050 = vmatpush1.xpose.msra.mxu0 0.0
    %1051 = vmatprep.subr.mxu0 0.0
    %1052 = vmatpush1.xpose.msra.mxu0 0.0
    %1053 = vmatprep.subr.mxu0 0.0
    %1054 = vmatpush1.xpose.msra.mxu0 0.0
    %1055 = vmatprep.subr.mxu0 0.0
    %1056 = vmatpush1.xpose.msra.mxu0 0.0
    %1057 = vmatprep.subr.mxu0 0.0
    %1058 = vmatpush1.xpose.msra.mxu0 0.0
    %1059 = vmatprep.subr.mxu0 0.0
    %1060 = vmatpush1.xpose.msra.mxu0 0.0
    %1061 = vmatprep.subr.mxu0 0.0
    %1062 = vmatpush1.xpose.msra.mxu0 0.0
    %1063 = vmatprep.subr.mxu0 0.0
    %1064 = vmatpush1.xpose.msra.mxu0 0.0
    %1065 = vmatprep.subr.mxu0 0.0
    %1066 = vmatpush1.xpose.msra.mxu0 0.0
    %1067 = vmatprep.subr.mxu0 0.0
    %1068 = vmatpush1.xpose.msra.mxu0 0.0
    %1069 = vmatprep.subr.mxu0 0.0
    %1070 = vmatpush1.xpose.msra.mxu0 0.0
    %1071 = vmatprep.subr.mxu0 0.0
    %1072 = vmatpush1.xpose.msra.mxu0 0.0
    %1073 = vmatprep.subr.mxu0 0.0
    %1074 = vmatpush1.xpose.msra.mxu0 0.0
    %1075 = vmatprep.subr.mxu0 0.0
    %1076 = vmatpush1.xpose.msra.mxu0 0.0
    %1077 = vmatprep.subr.mxu0 0.0
    %1078 = vmatpush1.xpose.msra.mxu0 0.0
    %1079 = vmatprep.subr.mxu0 0.0
    %1080 = vmatpush1.xpose.msra.mxu0 0.0
    %1081 = vmatprep.subr.mxu0 0.0
    %1082 = vmatpush1.xpose.msra.mxu0 0.0
    %1083 = vmatprep.subr.mxu0 0.0
    %1084 = vmatpush1.xpose.msra.mxu0 0.0
    %1085 = vmatprep.subr.mxu0 0.0
    %1086 = vmatpush1.xpose.msra.mxu0 0.0
    %1087 = vmatprep.subr.mxu0 0.0
    %1088 = vmatpush1.xpose.msra.mxu0 0.0
    %1089 = vmatprep.subr.mxu0 0.0
    %1090 = vmatpush1.xpose.msra.mxu0 0.0
    %1091 = vmatprep.subr.mxu0 0.0
    %1092 = vmatpush1.xpose.msra.mxu0 0.0
    %1093 = vmatprep.subr.mxu0 0.0
    %1094 = vmatpush1.xpose.msra.mxu0 0.0
    %1095 = vmatprep.subr.mxu0 0.0
    %1096 = vmatpush1.xpose.msra.mxu0 0.0
    %1097 = vmatprep.subr.mxu0 0.0
    %1098 = vmatpush1.xpose.msra.mxu0 0.0
    %1099 = vmatprep.mubr.f32.mxu0 0.0
    %1100 = vmatmul.mubr.f32.gmra.mrb[0].mxu0 %v1030
    %v1101 = vpop.f32.mrb[0].mxu0
    %v1102 = vadd.f32 0.0, %v1101
    %v1103 = vpop.f32.mrb[0].mxu0
    %1104 = vdwg.mxu0
    %v1106 = vsel %vm1028, %v365, 0
    %v1109 = vsel %vm1028, %v661, 0
    %1111 = vmatprep.subr.mxu0 0.0
    %1112 = vmatpush1.xpose.msra.mxu0 %v1109
    %1113 = vmatprep.subr.mxu0 0.0
    %1114 = vmatpush1.xpose.msra.mxu0 0.0
    %1115 = vmatprep.subr.mxu0 0.0
    %1116 = vmatpush1.xpose.msra.mxu0 0.0
    %1117 = vmatprep.subr.mxu0 0.0
    %1118 = vmatpush1.xpose.msra.mxu0 0.0
    %1119 = vmatprep.subr.mxu0 0.0
    %1120 = vmatpush1.xpose.msra.mxu0 0.0
    %1121 = vmatprep.subr.mxu0 0.0
    %1122 = vmatpush1.xpose.msra.mxu0 0.0
    %1123 = vmatprep.subr.mxu0 0.0
    %1124 = vmatpush1.xpose.msra.mxu0 0.0
    %1125 = vmatprep.subr.mxu0 0.0
    %1126 = vmatpush1.xpose.msra.mxu0 0.0
    %1127 = vmatprep.subr.mxu0 0.0
    %1128 = vmatpush1.xpose.msra.mxu0 0.0
    %1129 = vmatprep.subr.mxu0 0.0
    %1130 = vmatpush1.xpose.msra.mxu0 0.0
    %1131 = vmatprep.subr.mxu0 0.0
    %1132 = vmatpush1.xpose.msra.mxu0 0.0
    %1133 = vmatprep.subr.mxu0 0.0
    %1134 = vmatpush1.xpose.msra.mxu0 0.0
    %1135 = vmatprep.subr.mxu0 0.0
    %1136 = vmatpush1.xpose.msra.mxu0 0.0
    %1137 = vmatprep.subr.mxu0 0.0
    %1138 = vmatpush1.xpose.msra.mxu0 0.0
    %1139 = vmatprep.subr.mxu0 0.0
    %1140 = vmatpush1.xpose.msra.mxu0 0.0
    %1141 = vmatprep.subr.mxu0 0.0
    %1142 = vmatpush1.xpose.msra.mxu0 0.0
    %1143 = vmatprep.subr.mxu0 0.0
    %1144 = vmatpush1.xpose.msra.mxu0 0.0
    %1145 = vmatprep.subr.mxu0 0.0
    %1146 = vmatpush1.xpose.msra.mxu0 0.0
    %1147 = vmatprep.subr.mxu0 0.0
    %1148 = vmatpush1.xpose.msra.mxu0 0.0
    %1149 = vmatprep.subr.mxu0 0.0
    %1150 = vmatpush1.xpose.msra.mxu0 0.0
    %1151 = vmatprep.subr.mxu0 0.0
    %1152 = vmatpush1.xpose.msra.mxu0 0.0
    %1153 = vmatprep.subr.mxu0 0.0
    %1154 = vmatpush1.xpose.msra.mxu0 0.0
    %1155 = vmatprep.subr.mxu0 0.0
    %1156 = vmatpush1.xpose.msra.mxu0 0.0
    %1157 = vmatprep.subr.mxu0 0.0
    %1158 = vmatpush1.xpose.msra.mxu0 0.0
    %1159 = vmatprep.subr.mxu0 0.0
    %1160 = vmatpush1.xpose.msra.mxu0 0.0
    %1161 = vmatprep.subr.mxu0 0.0
    %1162 = vmatpush1.xpose.msra.mxu0 0.0
    %1163 = vmatprep.subr.mxu0 0.0
    %1164 = vmatpush1.xpose.msra.mxu0 0.0
    %1165 = vmatprep.subr.mxu0 0.0
    %1166 = vmatpush1.xpose.msra.mxu0 0.0
    %1167 = vmatprep.subr.mxu0 0.0
    %1168 = vmatpush1.xpose.msra.mxu0 0.0
    %1169 = vmatprep.subr.mxu0 0.0
    %1170 = vmatpush1.xpose.msra.mxu0 0.0
    %1171 = vmatprep.subr.mxu0 0.0
    %1172 = vmatpush1.xpose.msra.mxu0 0.0
    %1173 = vmatprep.subr.mxu0 0.0
    %1174 = vmatpush1.xpose.msra.mxu0 0.0
    %1175 = vmatprep.mubr.f32.mxu0 0.0
    %1176 = vmatmul.mubr.f32.gmra.mrb[0].mxu0 %v1106
    %v1177 = vpop.f32.mrb[0].mxu0
    %v1178 = vadd.f32 0.0, %v1177
    %v1179 = vpop.f32.mrb[0].mxu0
    %1180 = vdwg.mxu0
    %v1182 = vsel %vm1028, %v366, 0
    %v1185 = vsel %vm1028, %v662, 0
    %1187 = vmatprep.subr.mxu0 0.0
    %1188 = vmatpush1.xpose.msra.mxu0 %v1185
    %1189 = vmatprep.subr.mxu0 0.0
    %1190 = vmatpush1.xpose.msra.mxu0 0.0
    %1191 = vmatprep.subr.mxu0 0.0
    %1192 = vmatpush1.xpose.msra.mxu0 0.0
    %1193 = vmatprep.subr.mxu0 0.0
    %1194 = vmatpush1.xpose.msra.mxu0 0.0
    %1195 = vmatprep.subr.mxu0 0.0
    %1196 = vmatpush1.xpose.msra.mxu0 0.0
    %1197 = vmatprep.subr.mxu0 0.0
    %1198 = vmatpush1.xpose.msra.mxu0 0.0
    %1199 = vmatprep.subr.mxu0 0.0
    %1200 = vmatpush1.xpose.msra.mxu0 0.0
    %1201 = vmatprep.subr.mxu0 0.0
    %1202 = vmatpush1.xpose.msra.mxu0 0.0
    %1203 = vmatprep.subr.mxu0 0.0
    %1204 = vmatpush1.xpose.msra.mxu0 0.0
    %1205 = vmatprep.subr.mxu0 0.0
    %1206 = vmatpush1.xpose.msra.mxu0 0.0
    %1207 = vmatprep.subr.mxu0 0.0
    %1208 = vmatpush1.xpose.msra.mxu0 0.0
    %1209 = vmatprep.subr.mxu0 0.0
    %1210 = vmatpush1.xpose.msra.mxu0 0.0
    %1211 = vmatprep.subr.mxu0 0.0
    %1212 = vmatpush1.xpose.msra.mxu0 0.0
    %1213 = vmatprep.subr.mxu0 0.0
    %1214 = vmatpush1.xpose.msra.mxu0 0.0
    %1215 = vmatprep.subr.mxu0 0.0
    %1216 = vmatpush1.xpose.msra.mxu0 0.0
    %1217 = vmatprep.subr.mxu0 0.0
    %1218 = vmatpush1.xpose.msra.mxu0 0.0
    %1219 = vmatprep.subr.mxu0 0.0
    %1220 = vmatpush1.xpose.msra.mxu0 0.0
    %1221 = vmatprep.subr.mxu0 0.0
    %1222 = vmatpush1.xpose.msra.mxu0 0.0
    %1223 = vmatprep.subr.mxu0 0.0
    %1224 = vmatpush1.xpose.msra.mxu0 0.0
    %1225 = vmatprep.subr.mxu0 0.0
    %1226 = vmatpush1.xpose.msra.mxu0 0.0
    %1227 = vmatprep.subr.mxu0 0.0
    %1228 = vmatpush1.xpose.msra.mxu0 0.0
    %1229 = vmatprep.subr.mxu0 0.0
    %1230 = vmatpush1.xpose.msra.mxu0 0.0
    %1231 = vmatprep.subr.mxu0 0.0
    %1232 = vmatpush1.xpose.msra.mxu0 0.0
    %1233 = vmatprep.subr.mxu0 0.0
    %1234 = vmatpush1.xpose.msra.mxu0 0.0
    %1235 = vmatprep.subr.mxu0 0.0
    %1236 = vmatpush1.xpose.msra.mxu0 0.0
    %1237 = vmatprep.subr.mxu0 0.0
    %1238 = vmatpush1.xpose.msra.mxu0 0.0
    %1239 = vmatprep.subr.mxu0 0.0
    %1240 = vmatpush1.xpose.msra.mxu0 0.0
    %1241 = vmatprep.subr.mxu0 0.0
    %1242 = vmatpush1.xpose.msra.mxu0 0.0
    %1243 = vmatprep.subr.mxu0 0.0
    %1244 = vmatpush1.xpose.msra.mxu0 0.0
    %1245 = vmatprep.subr.mxu0 0.0
    %1246 = vmatpush1.xpose.msra.mxu0 0.0
    %1247 = vmatprep.subr.mxu0 0.0
    %1248 = vmatpush1.xpose.msra.mxu0 0.0
    %1249 = vmatprep.subr.mxu0 0.0
    %1250 = vmatpush1.xpose.msra.mxu0 0.0
    %1251 = vmatprep.mubr.f32.mxu0 0.0
    %1252 = vmatmul.mubr.f32.gmra.mrb[0].mxu0 %v1182
    %v1253 = vpop.f32.mrb[0].mxu0
    %v1254 = vadd.f32 0.0, %v1253
    %v1255 = vpop.f32.mrb[0].mxu0
    %1256 = vdwg.mxu0
    %v1258 = vsel %vm1028, %v367, 0
    %v1261 = vsel %vm1028, %v663, 0
    %1263 = vmatprep.subr.mxu0 0.0
    %1264 = vmatpush1.xpose.msra.mxu0 %v1261
    %1265 = vmatprep.subr.mxu0 0.0
    %1266 = vmatpush1.xpose.msra.mxu0 0.0
    %1267 = vmatprep.subr.mxu0 0.0
    %1268 = vmatpush1.xpose.msra.mxu0 0.0
    %1269 = vmatprep.subr.mxu0 0.0
    %1270 = vmatpush1.xpose.msra.mxu0 0.0
    %1271 = vmatprep.subr.mxu0 0.0
    %1272 = vmatpush1.xpose.msra.mxu0 0.0
    %1273 = vmatprep.subr.mxu0 0.0
    %1274 = vmatpush1.xpose.msra.mxu0 0.0
    %1275 = vmatprep.subr.mxu0 0.0
    %1276 = vmatpush1.xpose.msra.mxu0 0.0
    %1277 = vmatprep.subr.mxu0 0.0
    %1278 = vmatpush1.xpose.msra.mxu0 0.0
    %1279 = vmatprep.subr.mxu0 0.0
    %1280 = vmatpush1.xpose.msra.mxu0 0.0
    %1281 = vmatprep.subr.mxu0 0.0
    %1282 = vmatpush1.xpose.msra.mxu0 0.0
    %1283 = vmatprep.subr.mxu0 0.0
    %1284 = vmatpush1.xpose.msra.mxu0 0.0
    %1285 = vmatprep.subr.mxu0 0.0
    %1286 = vmatpush1.xpose.msra.mxu0 0.0
    %1287 = vmatprep.subr.mxu0 0.0
    %1288 = vmatpush1.xpose.msra.mxu0 0.0
    %1289 = vmatprep.subr.mxu0 0.0
    %1290 = vmatpush1.xpose.msra.mxu0 0.0
    %1291 = vmatprep.subr.mxu0 0.0
    %1292 = vmatpush1.xpose.msra.mxu0 0.0
    %1293 = vmatprep.subr.mxu0 0.0
    %1294 = vmatpush1.xpose.msra.mxu0 0.0
    %1295 = vmatprep.subr.mxu0 0.0
    %1296 = vmatpush1.xpose.msra.mxu0 0.0
    %1297 = vmatprep.subr.mxu0 0.0
    %1298 = vmatpush1.xpose.msra.mxu0 0.0
    %1299 = vmatprep.subr.mxu0 0.0
    %1300 = vmatpush1.xpose.msra.mxu0 0.0
    %1301 = vmatprep.subr.mxu0 0.0
    %1302 = vmatpush1.xpose.msra.mxu0 0.0
    %1303 = vmatprep.subr.mxu0 0.0
    %1304 = vmatpush1.xpose.msra.mxu0 0.0
    %1305 = vmatprep.subr.mxu0 0.0
    %1306 = vmatpush1.xpose.msra.mxu0 0.0
    %1307 = vmatprep.subr.mxu0 0.0
    %1308 = vmatpush1.xpose.msra.mxu0 0.0
    %1309 = vmatprep.subr.mxu0 0.0
    %1310 = vmatpush1.xpose.msra.mxu0 0.0
    %1311 = vmatprep.subr.mxu0 0.0
    %1312 = vmatpush1.xpose.msra.mxu0 0.0
    %1313 = vmatprep.subr.mxu0 0.0
    %1314 = vmatpush1.xpose.msra.mxu0 0.0
    %1315 = vmatprep.subr.mxu0 0.0
    %1316 = vmatpush1.xpose.msra.mxu0 0.0
    %1317 = vmatprep.subr.mxu0 0.0
    %1318 = vmatpush1.xpose.msra.mxu0 0.0
    %1319 = vmatprep.subr.mxu0 0.0
    %1320 = vmatpush1.xpose.msra.mxu0 0.0
    %1321 = vmatprep.subr.mxu0 0.0
    %1322 = vmatpush1.xpose.msra.mxu0 0.0
    %1323 = vmatprep.subr.mxu0 0.0
    %1324 = vmatpush1.xpose.msra.mxu0 0.0
    %1325 = vmatprep.subr.mxu0 0.0
    %1326 = vmatpush1.xpose.msra.mxu0 0.0
    %1327 = vmatprep.mubr.f32.mxu0 0.0
    %1328 = vmatmul.mubr.f32.gmra.mrb[0].mxu0 %v1258
    %v1329 = vpop.f32.mrb[0].mxu0
    %v1330 = vadd.f32 0.0, %v1329
    %v1331 = vpop.f32.mrb[0].mxu0
    %1332 = vdwg.mxu0
    %v1334 = vsel %vm1028, %v432, 0
    %v1337 = vsel %vm1028, %v728, 0
    %1339 = vmatprep.subr.mxu0 0.0
    %1340 = vmatpush1.xpose.msra.mxu0 %v1337
    %1341 = vmatprep.subr.mxu0 0.0
    %1342 = vmatpush1.xpose.msra.mxu0 0.0
    %1343 = vmatprep.subr.mxu0 0.0
    %1344 = vmatpush1.xpose.msra.mxu0 0.0
    %1345 = vmatprep.subr.mxu0 0.0
    %1346 = vmatpush1.xpose.msra.mxu0 0.0
    %1347 = vmatprep.subr.mxu0 0.0
    %1348 = vmatpush1.xpose.msra.mxu0 0.0
    %1349 = vmatprep.subr.mxu0 0.0
    %1350 = vmatpush1.xpose.msra.mxu0 0.0
    %1351 = vmatprep.subr.mxu0 0.0
    %1352 = vmatpush1.xpose.msra.mxu0 0.0
    %1353 = vmatprep.subr.mxu0 0.0
    %1354 = vmatpush1.xpose.msra.mxu0 0.0
    %1355 = vmatprep.subr.mxu0 0.0
    %1356 = vmatpush1.xpose.msra.mxu0 0.0
    %1357 = vmatprep.subr.mxu0 0.0
    %1358 = vmatpush1.xpose.msra.mxu0 0.0
    %1359 = vmatprep.subr.mxu0 0.0
    %1360 = vmatpush1.xpose.msra.mxu0 0.0
    %1361 = vmatprep.subr.mxu0 0.0
    %1362 = vmatpush1.xpose.msra.mxu0 0.0
    %1363 = vmatprep.subr.mxu0 0.0
    %1364 = vmatpush1.xpose.msra.mxu0 0.0
    %1365 = vmatprep.subr.mxu0 0.0
    %1366 = vmatpush1.xpose.msra.mxu0 0.0
    %1367 = vmatprep.subr.mxu0 0.0
    %1368 = vmatpush1.xpose.msra.mxu0 0.0
    %1369 = vmatprep.subr.mxu0 0.0
    %1370 = vmatpush1.xpose.msra.mxu0 0.0
    %1371 = vmatprep.subr.mxu0 0.0
    %1372 = vmatpush1.xpose.msra.mxu0 0.0
    %1373 = vmatprep.subr.mxu0 0.0
    %1374 = vmatpush1.xpose.msra.mxu0 0.0
    %1375 = vmatprep.subr.mxu0 0.0
    %1376 = vmatpush1.xpose.msra.mxu0 0.0
    %1377 = vmatprep.subr.mxu0 0.0
    %1378 = vmatpush1.xpose.msra.mxu0 0.0
    %1379 = vmatprep.subr.mxu0 0.0
    %1380 = vmatpush1.xpose.msra.mxu0 0.0
    %1381 = vmatprep.subr.mxu0 0.0
    %1382 = vmatpush1.xpose.msra.mxu0 0.0
    %1383 = vmatprep.subr.mxu0 0.0
    %1384 = vmatpush1.xpose.msra.mxu0 0.0
    %1385 = vmatprep.subr.mxu0 0.0
    %1386 = vmatpush1.xpose.msra.mxu0 0.0
    %1387 = vmatprep.subr.mxu0 0.0
    %1388 = vmatpush1.xpose.msra.mxu0 0.0
    %1389 = vmatprep.subr.mxu0 0.0
    %1390 = vmatpush1.xpose.msra.mxu0 0.0
    %1391 = vmatprep.subr.mxu0 0.0
    %1392 = vmatpush1.xpose.msra.mxu0 0.0
    %1393 = vmatprep.subr.mxu0 0.0
    %1394 = vmatpush1.xpose.msra.mxu0 0.0
    %1395 = vmatprep.subr.mxu0 0.0
    %1396 = vmatpush1.xpose.msra.mxu0 0.0
    %1397 = vmatprep.subr.mxu0 0.0
    %1398 = vmatpush1.xpose.msra.mxu0 0.0
    %1399 = vmatprep.subr.mxu0 0.0
    %1400 = vmatpush1.xpose.msra.mxu0 0.0
    %1401 = vmatprep.subr.mxu0 0.0
    %1402 = vmatpush1.xpose.msra.mxu0 0.0
    %1403 = vmatprep.mubr.f32.mxu0 0.0
    %1404 = vmatmul.mubr.f32.gmra.mrb[0].mxu0 %v1334
    %v1405 = vpop.f32.mrb[0].mxu0
    %v1406 = vadd.f32 0.0, %v1405
    %v1407 = vpop.f32.mrb[0].mxu0
    %1408 = vdwg.mxu0
    %v1410 = vsel %vm1028, %v433, 0
    %v1413 = vsel %vm1028, %v729, 0
    %1415 = vmatprep.subr.mxu0 0.0
    %1416 = vmatpush1.xpose.msra.mxu0 %v1413
    %1417 = vmatprep.subr.mxu0 0.0
    %1418 = vmatpush1.xpose.msra.mxu0 0.0
    %1419 = vmatprep.subr.mxu0 0.0
    %1420 = vmatpush1.xpose.msra.mxu0 0.0
    %1421 = vmatprep.subr.mxu0 0.0
    %1422 = vmatpush1.xpose.msra.mxu0 0.0
    %1423 = vmatprep.subr.mxu0 0.0
    %1424 = vmatpush1.xpose.msra.mxu0 0.0
    %1425 = vmatprep.subr.mxu0 0.0
    %1426 = vmatpush1.xpose.msra.mxu0 0.0
    %1427 = vmatprep.subr.mxu0 0.0
    %1428 = vmatpush1.xpose.msra.mxu0 0.0
    %1429 = vmatprep.subr.mxu0 0.0
    %1430 = vmatpush1.xpose.msra.mxu0 0.0
    %1431 = vmatprep.subr.mxu0 0.0
    %1432 = vmatpush1.xpose.msra.mxu0 0.0
    %1433 = vmatprep.subr.mxu0 0.0
    %1434 = vmatpush1.xpose.msra.mxu0 0.0
    %1435 = vmatprep.subr.mxu0 0.0
    %1436 = vmatpush1.xpose.msra.mxu0 0.0
    %1437 = vmatprep.subr.mxu0 0.0
    %1438 = vmatpush1.xpose.msra.mxu0 0.0
    %1439 = vmatprep.subr.mxu0 0.0
    %1440 = vmatpush1.xpose.msra.mxu0 0.0
    %1441 = vmatprep.subr.mxu0 0.0
    %1442 = vmatpush1.xpose.msra.mxu0 0.0
    %1443 = vmatprep.subr.mxu0 0.0
    %1444 = vmatpush1.xpose.msra.mxu0 0.0
    %1445 = vmatprep.subr.mxu0 0.0
    %1446 = vmatpush1.xpose.msra.mxu0 0.0
    %1447 = vmatprep.subr.mxu0 0.0
    %1448 = vmatpush1.xpose.msra.mxu0 0.0
    %1449 = vmatprep.subr.mxu0 0.0
    %1450 = vmatpush1.xpose.msra.mxu0 0.0
    %1451 = vmatprep.subr.mxu0 0.0
    %1452 = vmatpush1.xpose.msra.mxu0 0.0
    %1453 = vmatprep.subr.mxu0 0.0
    %1454 = vmatpush1.xpose.msra.mxu0 0.0
    %1455 = vmatprep.subr.mxu0 0.0
    %1456 = vmatpush1.xpose.msra.mxu0 0.0
    %1457 = vmatprep.subr.mxu0 0.0
    %1458 = vmatpush1.xpose.msra.mxu0 0.0
    %1459 = vmatprep.subr.mxu0 0.0
    %1460 = vmatpush1.xpose.msra.mxu0 0.0
    %1461 = vmatprep.subr.mxu0 0.0
    %1462 = vmatpush1.xpose.msra.mxu0 0.0
    %1463 = vmatprep.subr.mxu0 0.0
    %1464 = vmatpush1.xpose.msra.mxu0 0.0
    %1465 = vmatprep.subr.mxu0 0.0
    %1466 = vmatpush1.xpose.msra.mxu0 0.0
    %1467 = vmatprep.subr.mxu0 0.0
    %1468 = vmatpush1.xpose.msra.mxu0 0.0
    %1469 = vmatprep.subr.mxu0 0.0
    %1470 = vmatpush1.xpose.msra.mxu0 0.0
    %1471 = vmatprep.subr.mxu0 0.0
    %1472 = vmatpush1.xpose.msra.mxu0 0.0
    %1473 = vmatprep.subr.mxu0 0.0
    %1474 = vmatpush1.xpose.msra.mxu0 0.0
    %1475 = vmatprep.subr.mxu0 0.0
    %1476 = vmatpush1.xpose.msra.mxu0 0.0
    %1477 = vmatprep.subr.mxu0 0.0
    %1478 = vmatpush1.xpose.msra.mxu0 0.0
    %1479 = vmatprep.mubr.f32.mxu0 0.0
    %1480 = vmatmul.mubr.f32.gmra.mrb[0].mxu0 %v1410
    %v1481 = vpop.f32.mrb[0].mxu0
    %v1482 = vadd.f32 0.0, %v1481
    %v1483 = vpop.f32.mrb[0].mxu0
    %1484 = vdwg.mxu0
    %v1486 = vsel %vm1028, %v434, 0
    %v1489 = vsel %vm1028, %v730, 0
    %1491 = vmatprep.subr.mxu0 0.0
    %1492 = vmatpush1.xpose.msra.mxu0 %v1489
    %1493 = vmatprep.subr.mxu0 0.0
    %1494 = vmatpush1.xpose.msra.mxu0 0.0
    %1495 = vmatprep.subr.mxu0 0.0
    %1496 = vmatpush1.xpose.msra.mxu0 0.0
    %1497 = vmatprep.subr.mxu0 0.0
    %1498 = vmatpush1.xpose.msra.mxu0 0.0
    %1499 = vmatprep.subr.mxu0 0.0
    %1500 = vmatpush1.xpose.msra.mxu0 0.0
    %1501 = vmatprep.subr.mxu0 0.0
    %1502 = vmatpush1.xpose.msra.mxu0 0.0
    %1503 = vmatprep.subr.mxu0 0.0
    %1504 = vmatpush1.xpose.msra.mxu0 0.0
    %1505 = vmatprep.subr.mxu0 0.0
    %1506 = vmatpush1.xpose.msra.mxu0 0.0
    %1507 = vmatprep.subr.mxu0 0.0
    %1508 = vmatpush1.xpose.msra.mxu0 0.0
    %1509 = vmatprep.subr.mxu0 0.0
    %1510 = vmatpush1.xpose.msra.mxu0 0.0
    %1511 = vmatprep.subr.mxu0 0.0
    %1512 = vmatpush1.xpose.msra.mxu0 0.0
    %1513 = vmatprep.subr.mxu0 0.0
    %1514 = vmatpush1.xpose.msra.mxu0 0.0
    %1515 = vmatprep.subr.mxu0 0.0
    %1516 = vmatpush1.xpose.msra.mxu0 0.0
    %1517 = vmatprep.subr.mxu0 0.0
    %1518 = vmatpush1.xpose.msra.mxu0 0.0
    %1519 = vmatprep.subr.mxu0 0.0
    %1520 = vmatpush1.xpose.msra.mxu0 0.0
    %1521 = vmatprep.subr.mxu0 0.0
    %1522 = vmatpush1.xpose.msra.mxu0 0.0
    %1523 = vmatprep.subr.mxu0 0.0
    %1524 = vmatpush1.xpose.msra.mxu0 0.0
    %1525 = vmatprep.subr.mxu0 0.0
    %1526 = vmatpush1.xpose.msra.mxu0 0.0
    %1527 = vmatprep.subr.mxu0 0.0
    %1528 = vmatpush1.xpose.msra.mxu0 0.0
    %1529 = vmatprep.subr.mxu0 0.0
    %1530 = vmatpush1.xpose.msra.mxu0 0.0
    %1531 = vmatprep.subr.mxu0 0.0
    %1532 = vmatpush1.xpose.msra.mxu0 0.0
    %1533 = vmatprep.subr.mxu0 0.0
    %1534 = vmatpush1.xpose.msra.mxu0 0.0
    %1535 = vmatprep.subr.mxu0 0.0
    %1536 = vmatpush1.xpose.msra.mxu0 0.0
    %1537 = vmatprep.subr.mxu0 0.0
    %1538 = vmatpush1.xpose.msra.mxu0 0.0
    %1539 = vmatprep.subr.mxu0 0.0
    %1540 = vmatpush1.xpose.msra.mxu0 0.0
    %1541 = vmatprep.subr.mxu0 0.0
    %1542 = vmatpush1.xpose.msra.mxu0 0.0
    %1543 = vmatprep.subr.mxu0 0.0
    %1544 = vmatpush1.xpose.msra.mxu0 0.0
    %1545 = vmatprep.subr.mxu0 0.0
    %1546 = vmatpush1.xpose.msra.mxu0 0.0
    %1547 = vmatprep.subr.mxu0 0.0
    %1548 = vmatpush1.xpose.msra.mxu0 0.0
    %1549 = vmatprep.subr.mxu0 0.0
    %1550 = vmatpush1.xpose.msra.mxu0 0.0
    %1551 = vmatprep.subr.mxu0 0.0
    %1552 = vmatpush1.xpose.msra.mxu0 0.0
    %1553 = vmatprep.subr.mxu0 0.0
    %1554 = vmatpush1.xpose.msra.mxu0 0.0
    %1555 = vmatprep.mubr.f32.mxu0 0.0
    %1556 = vmatmul.mubr.f32.gmra.mrb[0].mxu0 %v1486
    %v1557 = vpop.f32.mrb[0].mxu0
    %v1558 = vadd.f32 0.0, %v1557
    %v1559 = vpop.f32.mrb[0].mxu0
    %1560 = vdwg.mxu0
    %v1562 = vsel %vm1028, %v435, 0
    %v1565 = vsel %vm1028, %v731, 0
    %1567 = vmatprep.subr.mxu0 0.0
    %1568 = vmatpush1.xpose.msra.mxu0 %v1565
    %1569 = vmatprep.subr.mxu0 0.0
    %1570 = vmatpush1.xpose.msra.mxu0 0.0
    %1571 = vmatprep.subr.mxu0 0.0
    %1572 = vmatpush1.xpose.msra.mxu0 0.0
    %1573 = vmatprep.subr.mxu0 0.0
    %1574 = vmatpush1.xpose.msra.mxu0 0.0
    %1575 = vmatprep.subr.mxu0 0.0
    %1576 = vmatpush1.xpose.msra.mxu0 0.0
    %1577 = vmatprep.subr.mxu0 0.0
    %1578 = vmatpush1.xpose.msra.mxu0 0.0
    %1579 = vmatprep.subr.mxu0 0.0
    %1580 = vmatpush1.xpose.msra.mxu0 0.0
    %1581 = vmatprep.subr.mxu0 0.0
    %1582 = vmatpush1.xpose.msra.mxu0 0.0
    %1583 = vmatprep.subr.mxu0 0.0
    %1584 = vmatpush1.xpose.msra.mxu0 0.0
    %1585 = vmatprep.subr.mxu0 0.0
    %1586 = vmatpush1.xpose.msra.mxu0 0.0
    %1587 = vmatprep.subr.mxu0 0.0
    %1588 = vmatpush1.xpose.msra.mxu0 0.0
    %1589 = vmatprep.subr.mxu0 0.0
    %1590 = vmatpush1.xpose.msra.mxu0 0.0
    %1591 = vmatprep.subr.mxu0 0.0
    %1592 = vmatpush1.xpose.msra.mxu0 0.0
    %1593 = vmatprep.subr.mxu0 0.0
    %1594 = vmatpush1.xpose.msra.mxu0 0.0
    %1595 = vmatprep.subr.mxu0 0.0
    %1596 = vmatpush1.xpose.msra.mxu0 0.0
    %1597 = vmatprep.subr.mxu0 0.0
    %1598 = vmatpush1.xpose.msra.mxu0 0.0
    %1599 = vmatprep.subr.mxu0 0.0
    %1600 = vmatpush1.xpose.msra.mxu0 0.0
    %1601 = vmatprep.subr.mxu0 0.0
    %1602 = vmatpush1.xpose.msra.mxu0 0.0
    %1603 = vmatprep.subr.mxu0 0.0
    %1604 = vmatpush1.xpose.msra.mxu0 0.0
    %1605 = vmatprep.subr.mxu0 0.0
    %1606 = vmatpush1.xpose.msra.mxu0 0.0
    %1607 = vmatprep.subr.mxu0 0.0
    %1608 = vmatpush1.xpose.msra.mxu0 0.0
    %1609 = vmatprep.subr.mxu0 0.0
    %1610 = vmatpush1.xpose.msra.mxu0 0.0
    %1611 = vmatprep.subr.mxu0 0.0
    %1612 = vmatpush1.xpose.msra.mxu0 0.0
    %1613 = vmatprep.subr.mxu0 0.0
    %1614 = vmatpush1.xpose.msra.mxu0 0.0
    %1615 = vmatprep.subr.mxu0 0.0
    %1616 = vmatpush1.xpose.msra.mxu0 0.0
    %1617 = vmatprep.subr.mxu0 0.0
    %1618 = vmatpush1.xpose.msra.mxu0 0.0
    %1619 = vmatprep.subr.mxu0 0.0
    %1620 = vmatpush1.xpose.msra.mxu0 0.0
    %1621 = vmatprep.subr.mxu0 0.0
    %1622 = vmatpush1.xpose.msra.mxu0 0.0
    %1623 = vmatprep.subr.mxu0 0.0
    %1624 = vmatpush1.xpose.msra.mxu0 0.0
    %1625 = vmatprep.subr.mxu0 0.0
    %1626 = vmatpush1.xpose.msra.mxu0 0.0
    %1627 = vmatprep.subr.mxu0 0.0
    %1628 = vmatpush1.xpose.msra.mxu0 0.0
    %1629 = vmatprep.subr.mxu0 0.0
    %1630 = vmatpush1.xpose.msra.mxu0 0.0
    %1631 = vmatprep.mubr.f32.mxu0 0.0
    %1632 = vmatmul.mubr.f32.gmra.mrb[0].mxu0 %v1562
    %v1633 = vpop.f32.mrb[0].mxu0
    %v1634 = vadd.f32 0.0, %v1633
    %v1635 = vpop.f32.mrb[0].mxu0
    %1636 = vdwg.mxu0
    %v1637 = vsel %vm1028, %v1102, -inf
    %1638 = vmax.xlane.f32.xlu0 %v1637
    %v1639 = vpop.xlane.xlu0 %1638
    %v1640 = vsel %vm1028, %v1178, -inf
    %1641 = vmax.xlane.f32.xlu0 %v1640
    %v1642 = vpop.xlane.xlu0 %1641
    %v1643 = vsel %vm1028, %v1254, -inf
    %1644 = vmax.xlane.f32.xlu0 %v1643
    %v1645 = vpop.xlane.xlu0 %1644
    %v1646 = vsel %vm1028, %v1330, -inf
    %1647 = vmax.xlane.f32.xlu0 %v1646
    %v1648 = vpop.xlane.xlu0 %1647
    %v1649 = vsel %vm1028, %v1406, -inf
    %1650 = vmax.xlane.f32.xlu0 %v1649
    %v1651 = vpop.xlane.xlu0 %1650
    %v1652 = vsel %vm1028, %v1482, -inf
    %1653 = vmax.xlane.f32.xlu0 %v1652
    %v1654 = vpop.xlane.xlu0 %1653
    %v1655 = vsel %vm1028, %v1558, -inf
    %1656 = vmax.xlane.f32.xlu0 %v1655
    %v1657 = vpop.xlane.xlu0 %1656
    %v1658 = vsel %vm1028, %v1634, -inf
    %1659 = vmax.xlane.f32.xlu0 %v1658
    %v1660 = vpop.xlane.xlu0 %1659
    %v1661 = vsub.f32 %v1102, %v1639
    %v1662 = vsub.f32 %v1178, %v1642
    %v1663 = vsub.f32 %v1254, %v1645
    %v1664 = vsub.f32 %v1330, %v1648
    %v1665 = vsub.f32 %v1406, %v1651
    %v1666 = vsub.f32 %v1482, %v1654
    %v1667 = vsub.f32 %v1558, %v1657
    %v1668 = vsub.f32 %v1634, %v1660
    %v1669 = vmul.f32 %v1661, 1.442695
    %v1670 = vpow.pop %v1669
    %v1671 = vmul.f32 %v1662, 1.442695
    %v1672 = vpow.pop %v1671
    %v1673 = vmul.f32 %v1663, 1.442695
    %v1674 = vpow.pop %v1673
    %v1675 = vmul.f32 %v1664, 1.442695
    %v1676 = vpow.pop %v1675
    %v1677 = vmul.f32 %v1665, 1.442695
    %v1678 = vpow.pop %v1677
    %v1679 = vmul.f32 %v1666, 1.442695
    %v1680 = vpow.pop %v1679
    %v1681 = vmul.f32 %v1667, 1.442695
    %v1682 = vpow.pop %v1681
    %v1683 = vmul.f32 %v1668, 1.442695
    %v1684 = vpow.pop %v1683
    %v1685 = vsel %vm1028, %v1670, 0.0
    %1686 = vadd.xlane.f32.xlu0 %v1685
    %v1687 = vpop.xlane.xlu0 %1686
    %v1688 = vsel %vm1028, %v1672, 0.0
    %1689 = vadd.xlane.f32.xlu0 %v1688
    %v1690 = vpop.xlane.xlu0 %1689
    %v1691 = vsel %vm1028, %v1674, 0.0
    %1692 = vadd.xlane.f32.xlu0 %v1691
    %v1693 = vpop.xlane.xlu0 %1692
    %v1694 = vsel %vm1028, %v1676, 0.0
    %1695 = vadd.xlane.f32.xlu0 %v1694
    %v1696 = vpop.xlane.xlu0 %1695
    %v1697 = vsel %vm1028, %v1678, 0.0
    %1698 = vadd.xlane.f32.xlu0 %v1697
    %v1699 = vpop.xlane.xlu0 %1698
    %v1700 = vsel %vm1028, %v1680, 0.0
    %1701 = vadd.xlane.f32.xlu0 %v1700
    %v1702 = vpop.xlane.xlu0 %1701
    %v1703 = vsel %vm1028, %v1682, 0.0
    %1704 = vadd.xlane.f32.xlu0 %v1703
    %v1705 = vpop.xlane.xlu0 %1704
    %v1706 = vsel %vm1028, %v1684, 0.0
    %1707 = vadd.xlane.f32.xlu0 %v1706
    %v1708 = vpop.xlane.xlu0 %1707
    %v1709 = vrcp.pop %v1687
    %v1710 = vrcp.pop %v1690
    %v1711 = vrcp.pop %v1693
    %v1712 = vrcp.pop %v1696
    %v1713 = vrcp.pop %v1699
    %v1714 = vrcp.pop %v1702
    %v1715 = vrcp.pop %v1705
    %v1716 = vrcp.pop %v1708
    %v1717 = vmul.f32 %v1670, %v1709
    %v1718 = vmul.f32 %v1672, %v1710
    %v1719 = vmul.f32 %v1674, %v1711
    %v1720 = vmul.f32 %v1676, %v1712
    %v1721 = vmul.f32 %v1678, %v1713
    %v1722 = vmul.f32 %v1680, %v1714
    %v1723 = vmul.f32 %v1682, %v1715
    %v1724 = vmul.f32 %v1684, %v1716
    %v1726 = vsel %vm1028, %v1717, 0
    %1728 = vmatprep.subr.mxu0 0.0
    %1729 = vmatpush1.msra.mxu0 %v956
    %1730 = vmatprep.subr.mxu0 0.0
    %1731 = vmatpush1.msra.mxu0 0.0
    %1732 = vmatprep.subr.mxu0 0.0
    %1733 = vmatpush1.msra.mxu0 0.0
    %1734 = vmatprep.subr.mxu0 0.0
    %1735 = vmatpush1.msra.mxu0 0.0
    %1736 = vmatprep.subr.mxu0 0.0
    %1737 = vmatpush1.msra.mxu0 0.0
    %1738 = vmatprep.subr.mxu0 0.0
    %1739 = vmatpush1.msra.mxu0 0.0
    %1740 = vmatprep.subr.mxu0 0.0
    %1741 = vmatpush1.msra.mxu0 0.0
    %1742 = vmatprep.subr.mxu0 0.0
    %1743 = vmatpush1.msra.mxu0 0.0
    %1744 = vmatprep.subr.mxu0 0.0
    %1745 = vmatpush1.msra.mxu0 0.0
    %1746 = vmatprep.subr.mxu0 0.0
    %1747 = vmatpush1.msra.mxu0 0.0
    %1748 = vmatprep.subr.mxu0 0.0
    %1749 = vmatpush1.msra.mxu0 0.0
    %1750 = vmatprep.subr.mxu0 0.0
    %1751 = vmatpush1.msra.mxu0 0.0
    %1752 = vmatprep.subr.mxu0 0.0
    %1753 = vmatpush1.msra.mxu0 0.0
    %1754 = vmatprep.subr.mxu0 0.0
    %1755 = vmatpush1.msra.mxu0 0.0
    %1756 = vmatprep.subr.mxu0 0.0
    %1757 = vmatpush1.msra.mxu0 0.0
    %1758 = vmatprep.subr.mxu0 0.0
    %1759 = vmatpush1.msra.mxu0 0.0
    %1760 = vmatprep.subr.mxu0 0.0
    %1761 = vmatpush1.msra.mxu0 0.0
    %1762 = vmatprep.subr.mxu0 0.0
    %1763 = vmatpush1.msra.mxu0 0.0
    %1764 = vmatprep.subr.mxu0 0.0
    %1765 = vmatpush1.msra.mxu0 0.0
    %1766 = vmatprep.subr.mxu0 0.0
    %1767 = vmatpush1.msra.mxu0 0.0
    %1768 = vmatprep.subr.mxu0 0.0
    %1769 = vmatpush1.msra.mxu0 0.0
    %1770 = vmatprep.subr.mxu0 0.0
    %1771 = vmatpush1.msra.mxu0 0.0
    %1772 = vmatprep.subr.mxu0 0.0
    %1773 = vmatpush1.msra.mxu0 0.0
    %1774 = vmatprep.subr.mxu0 0.0
    %1775 = vmatpush1.msra.mxu0 0.0
    %1776 = vmatprep.subr.mxu0 0.0
    %1777 = vmatpush1.msra.mxu0 0.0
    %1778 = vmatprep.subr.mxu0 0.0
    %1779 = vmatpush1.msra.mxu0 0.0
    %1780 = vmatprep.subr.mxu0 0.0
    %1781 = vmatpush1.msra.mxu0 0.0
    %1782 = vmatprep.subr.mxu0 0.0
    %1783 = vmatpush1.msra.mxu0 0.0
    %1784 = vmatprep.subr.mxu0 0.0
    %1785 = vmatpush1.msra.mxu0 0.0
    %1786 = vmatprep.subr.mxu0 0.0
    %1787 = vmatpush1.msra.mxu0 0.0
    %1788 = vmatprep.subr.mxu0 0.0
    %1789 = vmatpush1.msra.mxu0 0.0
    %1790 = vmatprep.subr.mxu0 0.0
    %1791 = vmatpush1.msra.mxu0 0.0
    %1792 = vmatprep.mubr.f32.mxu0 0.0
    %1793 = vmatmul.mubr.f32.gmra.mrb[0].mxu0 %v1726
    %v1794 = vpop.f32.mrb[0].mxu0
    %v1795 = vadd.f32 0.0, %v1794
    %v1796 = vpop.f32.mrb[0].mxu0
    %1797 = vdwg.mxu0
    %v1799 = vsel %vm1028, %v1718, 0
    %1801 = vmatprep.subr.mxu0 0.0
    %1802 = vmatpush1.msra.mxu0 %v957
    %1803 = vmatprep.subr.mxu0 0.0
    %1804 = vmatpush1.msra.mxu0 0.0
    %1805 = vmatprep.subr.mxu0 0.0
    %1806 = vmatpush1.msra.mxu0 0.0
    %1807 = vmatprep.subr.mxu0 0.0
    %1808 = vmatpush1.msra.mxu0 0.0
    %1809 = vmatprep.subr.mxu0 0.0
    %1810 = vmatpush1.msra.mxu0 0.0
    %1811 = vmatprep.subr.mxu0 0.0
    %1812 = vmatpush1.msra.mxu0 0.0
    %1813 = vmatprep.subr.mxu0 0.0
    %1814 = vmatpush1.msra.mxu0 0.0
    %1815 = vmatprep.subr.mxu0 0.0
    %1816 = vmatpush1.msra.mxu0 0.0
    %1817 = vmatprep.subr.mxu0 0.0
    %1818 = vmatpush1.msra.mxu0 0.0
    %1819 = vmatprep.subr.mxu0 0.0
    %1820 = vmatpush1.msra.mxu0 0.0
    %1821 = vmatprep.subr.mxu0 0.0
    %1822 = vmatpush1.msra.mxu0 0.0
    %1823 = vmatprep.subr.mxu0 0.0
    %1824 = vmatpush1.msra.mxu0 0.0
    %1825 = vmatprep.subr.mxu0 0.0
    %1826 = vmatpush1.msra.mxu0 0.0
    %1827 = vmatprep.subr.mxu0 0.0
    %1828 = vmatpush1.msra.mxu0 0.0
    %1829 = vmatprep.subr.mxu0 0.0
    %1830 = vmatpush1.msra.mxu0 0.0
    %1831 = vmatprep.subr.mxu0 0.0
    %1832 = vmatpush1.msra.mxu0 0.0
    %1833 = vmatprep.subr.mxu0 0.0
    %1834 = vmatpush1.msra.mxu0 0.0
    %1835 = vmatprep.subr.mxu0 0.0
    %1836 = vmatpush1.msra.mxu0 0.0
    %1837 = vmatprep.subr.mxu0 0.0
    %1838 = vmatpush1.msra.mxu0 0.0
    %1839 = vmatprep.subr.mxu0 0.0
    %1840 = vmatpush1.msra.mxu0 0.0
    %1841 = vmatprep.subr.mxu0 0.0
    %1842 = vmatpush1.msra.mxu0 0.0
    %1843 = vmatprep.subr.mxu0 0.0
    %1844 = vmatpush1.msra.mxu0 0.0
    %1845 = vmatprep.subr.mxu0 0.0
    %1846 = vmatpush1.msra.mxu0 0.0
    %1847 = vmatprep.subr.mxu0 0.0
    %1848 = vmatpush1.msra.mxu0 0.0
    %1849 = vmatprep.subr.mxu0 0.0
    %1850 = vmatpush1.msra.mxu0 0.0
    %1851 = vmatprep.subr.mxu0 0.0
    %1852 = vmatpush1.msra.mxu0 0.0
    %1853 = vmatprep.subr.mxu0 0.0
    %1854 = vmatpush1.msra.mxu0 0.0
    %1855 = vmatprep.subr.mxu0 0.0
    %1856 = vmatpush1.msra.mxu0 0.0
    %1857 = vmatprep.subr.mxu0 0.0
    %1858 = vmatpush1.msra.mxu0 0.0
    %1859 = vmatprep.subr.mxu0 0.0
    %1860 = vmatpush1.msra.mxu0 0.0
    %1861 = vmatprep.subr.mxu0 0.0
    %1862 = vmatpush1.msra.mxu0 0.0
    %1863 = vmatprep.subr.mxu0 0.0
    %1864 = vmatpush1.msra.mxu0 0.0
    %1865 = vmatprep.mubr.f32.mxu0 0.0
    %1866 = vmatmul.mubr.f32.gmra.mrb[0].mxu0 %v1799
    %v1867 = vpop.f32.mrb[0].mxu0
    %v1868 = vadd.f32 0.0, %v1867
    %v1869 = vpop.f32.mrb[0].mxu0
    %1870 = vdwg.mxu0
    %v1872 = vsel %vm1028, %v1719, 0
    %1874 = vmatprep.subr.mxu0 0.0
    %1875 = vmatpush1.msra.mxu0 %v958
    %1876 = vmatprep.subr.mxu0 0.0
    %1877 = vmatpush1.msra.mxu0 0.0
    %1878 = vmatprep.subr.mxu0 0.0
    %1879 = vmatpush1.msra.mxu0 0.0
    %1880 = vmatprep.subr.mxu0 0.0
    %1881 = vmatpush1.msra.mxu0 0.0
    %1882 = vmatprep.subr.mxu0 0.0
    %1883 = vmatpush1.msra.mxu0 0.0
    %1884 = vmatprep.subr.mxu0 0.0
    %1885 = vmatpush1.msra.mxu0 0.0
    %1886 = vmatprep.subr.mxu0 0.0
    %1887 = vmatpush1.msra.mxu0 0.0
    %1888 = vmatprep.subr.mxu0 0.0
    %1889 = vmatpush1.msra.mxu0 0.0
    %1890 = vmatprep.subr.mxu0 0.0
    %1891 = vmatpush1.msra.mxu0 0.0
    %1892 = vmatprep.subr.mxu0 0.0
    %1893 = vmatpush1.msra.mxu0 0.0
    %1894 = vmatprep.subr.mxu0 0.0
    %1895 = vmatpush1.msra.mxu0 0.0
    %1896 = vmatprep.subr.mxu0 0.0
    %1897 = vmatpush1.msra.mxu0 0.0
    %1898 = vmatprep.subr.mxu0 0.0
    %1899 = vmatpush1.msra.mxu0 0.0
    %1900 = vmatprep.subr.mxu0 0.0
    %1901 = vmatpush1.msra.mxu0 0.0
    %1902 = vmatprep.subr.mxu0 0.0
    %1903 = vmatpush1.msra.mxu0 0.0
    %1904 = vmatprep.subr.mxu0 0.0
    %1905 = vmatpush1.msra.mxu0 0.0
    %1906 = vmatprep.subr.mxu0 0.0
    %1907 = vmatpush1.msra.mxu0 0.0
    %1908 = vmatprep.subr.mxu0 0.0
    %1909 = vmatpush1.msra.mxu0 0.0
    %1910 = vmatprep.subr.mxu0 0.0
    %1911 = vmatpush1.msra.mxu0 0.0
    %1912 = vmatprep.subr.mxu0 0.0
    %1913 = vmatpush1.msra.mxu0 0.0
    %1914 = vmatprep.subr.mxu0 0.0
    %1915 = vmatpush1.msra.mxu0 0.0
    %1916 = vmatprep.subr.mxu0 0.0
    %1917 = vmatpush1.msra.mxu0 0.0
    %1918 = vmatprep.subr.mxu0 0.0
    %1919 = vmatpush1.msra.mxu0 0.0
    %1920 = vmatprep.subr.mxu0 0.0
    %1921 = vmatpush1.msra.mxu0 0.0
    %1922 = vmatprep.subr.mxu0 0.0
    %1923 = vmatpush1.msra.mxu0 0.0
    %1924 = vmatprep.subr.mxu0 0.0
    %1925 = vmatpush1.msra.mxu0 0.0
    %1926 = vmatprep.subr.mxu0 0.0
    %1927 = vmatpush1.msra.mxu0 0.0
    %1928 = vmatprep.subr.mxu0 0.0
    %1929 = vmatpush1.msra.mxu0 0.0
    %1930 = vmatprep.subr.mxu0 0.0
    %1931 = vmatpush1.msra.mxu0 0.0
    %1932 = vmatprep.subr.mxu0 0.0
    %1933 = vmatpush1.msra.mxu0 0.0
    %1934 = vmatprep.subr.mxu0 0.0
    %1935 = vmatpush1.msra.mxu0 0.0
    %1936 = vmatprep.subr.mxu0 0.0
    %1937 = vmatpush1.msra.mxu0 0.0
    %1938 = vmatprep.mubr.f32.mxu0 0.0
    %1939 = vmatmul.mubr.f32.gmra.mrb[0].mxu0 %v1872
    %v1940 = vpop.f32.mrb[0].mxu0
    %v1941 = vadd.f32 0.0, %v1940
    %v1942 = vpop.f32.mrb[0].mxu0
    %1943 = vdwg.mxu0
    %v1945 = vsel %vm1028, %v1720, 0
    %1947 = vmatprep.subr.mxu0 0.0
    %1948 = vmatpush1.msra.mxu0 %v959
    %1949 = vmatprep.subr.mxu0 0.0
    %1950 = vmatpush1.msra.mxu0 0.0
    %1951 = vmatprep.subr.mxu0 0.0
    %1952 = vmatpush1.msra.mxu0 0.0
    %1953 = vmatprep.subr.mxu0 0.0
    %1954 = vmatpush1.msra.mxu0 0.0
    %1955 = vmatprep.subr.mxu0 0.0
    %1956 = vmatpush1.msra.mxu0 0.0
    %1957 = vmatprep.subr.mxu0 0.0
    %1958 = vmatpush1.msra.mxu0 0.0
    %1959 = vmatprep.subr.mxu0 0.0
    %1960 = vmatpush1.msra.mxu0 0.0
    %1961 = vmatprep.subr.mxu0 0.0
    %1962 = vmatpush1.msra.mxu0 0.0
    %1963 = vmatprep.subr.mxu0 0.0
    %1964 = vmatpush1.msra.mxu0 0.0
    %1965 = vmatprep.subr.mxu0 0.0
    %1966 = vmatpush1.msra.mxu0 0.0
    %1967 = vmatprep.subr.mxu0 0.0
    %1968 = vmatpush1.msra.mxu0 0.0
    %1969 = vmatprep.subr.mxu0 0.0
    %1970 = vmatpush1.msra.mxu0 0.0
    %1971 = vmatprep.subr.mxu0 0.0
    %1972 = vmatpush1.msra.mxu0 0.0
    %1973 = vmatprep.subr.mxu0 0.0
    %1974 = vmatpush1.msra.mxu0 0.0
    %1975 = vmatprep.subr.mxu0 0.0
    %1976 = vmatpush1.msra.mxu0 0.0
    %1977 = vmatprep.subr.mxu0 0.0
    %1978 = vmatpush1.msra.mxu0 0.0
    %1979 = vmatprep.subr.mxu0 0.0
    %1980 = vmatpush1.msra.mxu0 0.0
    %1981 = vmatprep.subr.mxu0 0.0
    %1982 = vmatpush1.msra.mxu0 0.0
    %1983 = vmatprep.subr.mxu0 0.0
    %1984 = vmatpush1.msra.mxu0 0.0
    %1985 = vmatprep.subr.mxu0 0.0
    %1986 = vmatpush1.msra.mxu0 0.0
    %1987 = vmatprep.subr.mxu0 0.0
    %1988 = vmatpush1.msra.mxu0 0.0
    %1989 = vmatprep.subr.mxu0 0.0
    %1990 = vmatpush1.msra.mxu0 0.0
    %1991 = vmatprep.subr.mxu0 0.0
    %1992 = vmatpush1.msra.mxu0 0.0
    %1993 = vmatprep.subr.mxu0 0.0
    %1994 = vmatpush1.msra.mxu0 0.0
    %1995 = vmatprep.subr.mxu0 0.0
    %1996 = vmatpush1.msra.mxu0 0.0
    %1997 = vmatprep.subr.mxu0 0.0
    %1998 = vmatpush1.msra.mxu0 0.0
    %1999 = vmatprep.subr.mxu0 0.0
    %2000 = vmatpush1.msra.mxu0 0.0
    %2001 = vmatprep.subr.mxu0 0.0
    %2002 = vmatpush1.msra.mxu0 0.0
    %2003 = vmatprep.subr.mxu0 0.0
    %2004 = vmatpush1.msra.mxu0 0.0
    %2005 = vmatprep.subr.mxu0 0.0
    %2006 = vmatpush1.msra.mxu0 0.0
    %2007 = vmatprep.subr.mxu0 0.0
    %2008 = vmatpush1.msra.mxu0 0.0
    %2009 = vmatprep.subr.mxu0 0.0
    %2010 = vmatpush1.msra.mxu0 0.0
    %2011 = vmatprep.mubr.f32.mxu0 0.0
    %2012 = vmatmul.mubr.f32.gmra.mrb[0].mxu0 %v1945
    %v2013 = vpop.f32.mrb[0].mxu0
    %v2014 = vadd.f32 0.0, %v2013
    %v2015 = vpop.f32.mrb[0].mxu0
    %2016 = vdwg.mxu0
    %v2018 = vsel %vm1028, %v1721, 0
    %2020 = vmatprep.subr.mxu0 0.0
    %2021 = vmatpush1.msra.mxu0 %v1024
    %2022 = vmatprep.subr.mxu0 0.0
    %2023 = vmatpush1.msra.mxu0 0.0
    %2024 = vmatprep.subr.mxu0 0.0
    %2025 = vmatpush1.msra.mxu0 0.0
    %2026 = vmatprep.subr.mxu0 0.0
    %2027 = vmatpush1.msra.mxu0 0.0
    %2028 = vmatprep.subr.mxu0 0.0
    %2029 = vmatpush1.msra.mxu0 0.0
    %2030 = vmatprep.subr.mxu0 0.0
    %2031 = vmatpush1.msra.mxu0 0.0
    %2032 = vmatprep.subr.mxu0 0.0
    %2033 = vmatpush1.msra.mxu0 0.0
    %2034 = vmatprep.subr.mxu0 0.0
    %2035 = vmatpush1.msra.mxu0 0.0
    %2036 = vmatprep.subr.mxu0 0.0
    %2037 = vmatpush1.msra.mxu0 0.0
    %2038 = vmatprep.subr.mxu0 0.0
    %2039 = vmatpush1.msra.mxu0 0.0
    %2040 = vmatprep.subr.mxu0 0.0
    %2041 = vmatpush1.msra.mxu0 0.0
    %2042 = vmatprep.subr.mxu0 0.0
    %2043 = vmatpush1.msra.mxu0 0.0
    %2044 = vmatprep.subr.mxu0 0.0
    %2045 = vmatpush1.msra.mxu0 0.0
    %2046 = vmatprep.subr.mxu0 0.0
    %2047 = vmatpush1.msra.mxu0 0.0
    %2048 = vmatprep.subr.mxu0 0.0
    %2049 = vmatpush1.msra.mxu0 0.0
    %2050 = vmatprep.subr.mxu0 0.0
    %2051 = vmatpush1.msra.mxu0 0.0
    %2052 = vmatprep.subr.mxu0 0.0
    %2053 = vmatpush1.msra.mxu0 0.0
    %2054 = vmatprep.subr.mxu0 0.0
    %2055 = vmatpush1.msra.mxu0 0.0
    %2056 = vmatprep.subr.mxu0 0.0
    %2057 = vmatpush1.msra.mxu0 0.0
    %2058 = vmatprep.subr.mxu0 0.0
    %2059 = vmatpush1.msra.mxu0 0.0
    %2060 = vmatprep.subr.mxu0 0.0
    %2061 = vmatpush1.msra.mxu0 0.0
    %2062 = vmatprep.subr.mxu0 0.0
    %2063 = vmatpush1.msra.mxu0 0.0
    %2064 = vmatprep.subr.mxu0 0.0
    %2065 = vmatpush1.msra.mxu0 0.0
    %2066 = vmatprep.subr.mxu0 0.0
    %2067 = vmatpush1.msra.mxu0 0.0
    %2068 = vmatprep.subr.mxu0 0.0
    %2069 = vmatpush1.msra.mxu0 0.0
    %2070 = vmatprep.subr.mxu0 0.0
    %2071 = vmatpush1.msra.mxu0 0.0
    %2072 = vmatprep.subr.mxu0 0.0
    %2073 = vmatpush1.msra.mxu0 0.0
    %2074 = vmatprep.subr.mxu0 0.0
    %2075 = vmatpush1.msra.mxu0 0.0
    %2076 = vmatprep.subr.mxu0 0.0
    %2077 = vmatpush1.msra.mxu0 0.0
    %2078 = vmatprep.subr.mxu0 0.0
    %2079 = vmatpush1.msra.mxu0 0.0
    %2080 = vmatprep.subr.mxu0 0.0
    %2081 = vmatpush1.msra.mxu0 0.0
    %2082 = vmatprep.subr.mxu0 0.0
    %2083 = vmatpush1.msra.mxu0 0.0
    %2084 = vmatprep.mubr.f32.mxu0 0.0
    %2085 = vmatmul.mubr.f32.gmra.mrb[0].mxu0 %v2018
    %v2086 = vpop.f32.mrb[0].mxu0
    %v2087 = vadd.f32 0.0, %v2086
    %v2088 = vpop.f32.mrb[0].mxu0
    %2089 = vdwg.mxu0
    %v2091 = vsel %vm1028, %v1722, 0
    %2093 = vmatprep.subr.mxu0 0.0
    %2094 = vmatpush1.msra.mxu0 %v1025
    %2095 = vmatprep.subr.mxu0 0.0
    %2096 = vmatpush1.msra.mxu0 0.0
    %2097 = vmatprep.subr.mxu0 0.0
    %2098 = vmatpush1.msra.mxu0 0.0
    %2099 = vmatprep.subr.mxu0 0.0
    %2100 = vmatpush1.msra.mxu0 0.0
    %2101 = vmatprep.subr.mxu0 0.0
    %2102 = vmatpush1.msra.mxu0 0.0
    %2103 = vmatprep.subr.mxu0 0.0
    %2104 = vmatpush1.msra.mxu0 0.0
    %2105 = vmatprep.subr.mxu0 0.0
    %2106 = vmatpush1.msra.mxu0 0.0
    %2107 = vmatprep.subr.mxu0 0.0
    %2108 = vmatpush1.msra.mxu0 0.0
    %2109 = vmatprep.subr.mxu0 0.0
    %2110 = vmatpush1.msra.mxu0 0.0
    %2111 = vmatprep.subr.mxu0 0.0
    %2112 = vmatpush1.msra.mxu0 0.0
    %2113 = vmatprep.subr.mxu0 0.0
    %2114 = vmatpush1.msra.mxu0 0.0
    %2115 = vmatprep.subr.mxu0 0.0
    %2116 = vmatpush1.msra.mxu0 0.0
    %2117 = vmatprep.subr.mxu0 0.0
    %2118 = vmatpush1.msra.mxu0 0.0
    %2119 = vmatprep.subr.mxu0 0.0
    %2120 = vmatpush1.msra.mxu0 0.0
    %2121 = vmatprep.subr.mxu0 0.0
    %2122 = vmatpush1.msra.mxu0 0.0
    %2123 = vmatprep.subr.mxu0 0.0
    %2124 = vmatpush1.msra.mxu0 0.0
    %2125 = vmatprep.subr.mxu0 0.0
    %2126 = vmatpush1.msra.mxu0 0.0
    %2127 = vmatprep.subr.mxu0 0.0
    %2128 = vmatpush1.msra.mxu0 0.0
    %2129 = vmatprep.subr.mxu0 0.0
    %2130 = vmatpush1.msra.mxu0 0.0
    %2131 = vmatprep.subr.mxu0 0.0
    %2132 = vmatpush1.msra.mxu0 0.0
    %2133 = vmatprep.subr.mxu0 0.0
    %2134 = vmatpush1.msra.mxu0 0.0
    %2135 = vmatprep.subr.mxu0 0.0
    %2136 = vmatpush1.msra.mxu0 0.0
    %2137 = vmatprep.subr.mxu0 0.0
    %2138 = vmatpush1.msra.mxu0 0.0
    %2139 = vmatprep.subr.mxu0 0.0
    %2140 = vmatpush1.msra.mxu0 0.0
    %2141 = vmatprep.subr.mxu0 0.0
    %2142 = vmatpush1.msra.mxu0 0.0
    %2143 = vmatprep.subr.mxu0 0.0
    %2144 = vmatpush1.msra.mxu0 0.0
    %2145 = vmatprep.subr.mxu0 0.0
    %2146 = vmatpush1.msra.mxu0 0.0
    %2147 = vmatprep.subr.mxu0 0.0
    %2148 = vmatpush1.msra.mxu0 0.0
    %2149 = vmatprep.subr.mxu0 0.0
    %2150 = vmatpush1.msra.mxu0 0.0
    %2151 = vmatprep.subr.mxu0 0.0
    %2152 = vmatpush1.msra.mxu0 0.0
    %2153 = vmatprep.subr.mxu0 0.0
    %2154 = vmatpush1.msra.mxu0 0.0
    %2155 = vmatprep.subr.mxu0 0.0
    %2156 = vmatpush1.msra.mxu0 0.0
    %2157 = vmatprep.mubr.f32.mxu0 0.0
    %2158 = vmatmul.mubr.f32.gmra.mrb[0].mxu0 %v2091
    %v2159 = vpop.f32.mrb[0].mxu0
    %v2160 = vadd.f32 0.0, %v2159
    %v2161 = vpop.f32.mrb[0].mxu0
    %2162 = vdwg.mxu0
    %v2164 = vsel %vm1028, %v1723, 0
    %2166 = vmatprep.subr.mxu0 0.0
    %2167 = vmatpush1.msra.mxu0 %v1026
    %2168 = vmatprep.subr.mxu0 0.0
    %2169 = vmatpush1.msra.mxu0 0.0
    %2170 = vmatprep.subr.mxu0 0.0
    %2171 = vmatpush1.msra.mxu0 0.0
    %2172 = vmatprep.subr.mxu0 0.0
    %2173 = vmatpush1.msra.mxu0 0.0
    %2174 = vmatprep.subr.mxu0 0.0
    %2175 = vmatpush1.msra.mxu0 0.0
    %2176 = vmatprep.subr.mxu0 0.0
    %2177 = vmatpush1.msra.mxu0 0.0
    %2178 = vmatprep.subr.mxu0 0.0
    %2179 = vmatpush1.msra.mxu0 0.0
    %2180 = vmatprep.subr.mxu0 0.0
    %2181 = vmatpush1.msra.mxu0 0.0
    %2182 = vmatprep.subr.mxu0 0.0
    %2183 = vmatpush1.msra.mxu0 0.0
    %2184 = vmatprep.subr.mxu0 0.0
    %2185 = vmatpush1.msra.mxu0 0.0
    %2186 = vmatprep.subr.mxu0 0.0
    %2187 = vmatpush1.msra.mxu0 0.0
    %2188 = vmatprep.subr.mxu0 0.0
    %2189 = vmatpush1.msra.mxu0 0.0
    %2190 = vmatprep.subr.mxu0 0.0
    %2191 = vmatpush1.msra.mxu0 0.0
    %2192 = vmatprep.subr.mxu0 0.0
    %2193 = vmatpush1.msra.mxu0 0.0
    %2194 = vmatprep.subr.mxu0 0.0
    %2195 = vmatpush1.msra.mxu0 0.0
    %2196 = vmatprep.subr.mxu0 0.0
    %2197 = vmatpush1.msra.mxu0 0.0
    %2198 = vmatprep.subr.mxu0 0.0
    %2199 = vmatpush1.msra.mxu0 0.0
    %2200 = vmatprep.subr.mxu0 0.0
    %2201 = vmatpush1.msra.mxu0 0.0
    %2202 = vmatprep.subr.mxu0 0.0
    %2203 = vmatpush1.msra.mxu0 0.0
    %2204 = vmatprep.subr.mxu0 0.0
    %2205 = vmatpush1.msra.mxu0 0.0
    %2206 = vmatprep.subr.mxu0 0.0
    %2207 = vmatpush1.msra.mxu0 0.0
    %2208 = vmatprep.subr.mxu0 0.0
    %2209 = vmatpush1.msra.mxu0 0.0
    %2210 = vmatprep.subr.mxu0 0.0
    %2211 = vmatpush1.msra.mxu0 0.0
    %2212 = vmatprep.subr.mxu0 0.0
    %2213 = vmatpush1.msra.mxu0 0.0
    %2214 = vmatprep.subr.mxu0 0.0
    %2215 = vmatpush1.msra.mxu0 0.0
    %2216 = vmatprep.subr.mxu0 0.0
    %2217 = vmatpush1.msra.mxu0 0.0
    %2218 = vmatprep.subr.mxu0 0.0
    %2219 = vmatpush1.msra.mxu0 0.0
    %2220 = vmatprep.subr.mxu0 0.0
    %2221 = vmatpush1.msra.mxu0 0.0
    %2222 = vmatprep.subr.mxu0 0.0
    %2223 = vmatpush1.msra.mxu0 0.0
    %2224 = vmatprep.subr.mxu0 0.0
    %2225 = vmatpush1.msra.mxu0 0.0
    %2226 = vmatprep.subr.mxu0 0.0
    %2227 = vmatpush1.msra.mxu0 0.0
    %2228 = vmatprep.subr.mxu0 0.0
    %2229 = vmatpush1.msra.mxu0 0.0
    %2230 = vmatprep.mubr.f32.mxu0 0.0
    %2231 = vmatmul.mubr.f32.gmra.mrb[0].mxu0 %v2164
    %v2232 = vpop.f32.mrb[0].mxu0
    %v2233 = vadd.f32 0.0, %v2232
    %v2234 = vpop.f32.mrb[0].mxu0
    %2235 = vdwg.mxu0
    %v2237 = vsel %vm1028, %v1724, 0
    %2239 = vmatprep.subr.mxu0 0.0
    %2240 = vmatpush1.msra.mxu0 %v1027
    %2241 = vmatprep.subr.mxu0 0.0
    %2242 = vmatpush1.msra.mxu0 0.0
    %2243 = vmatprep.subr.mxu0 0.0
    %2244 = vmatpush1.msra.mxu0 0.0
    %2245 = vmatprep.subr.mxu0 0.0
    %2246 = vmatpush1.msra.mxu0 0.0
    %2247 = vmatprep.subr.mxu0 0.0
    %2248 = vmatpush1.msra.mxu0 0.0
    %2249 = vmatprep.subr.mxu0 0.0
    %2250 = vmatpush1.msra.mxu0 0.0
    %2251 = vmatprep.subr.mxu0 0.0
    %2252 = vmatpush1.msra.mxu0 0.0
    %2253 = vmatprep.subr.mxu0 0.0
    %2254 = vmatpush1.msra.mxu0 0.0
    %2255 = vmatprep.subr.mxu0 0.0
    %2256 = vmatpush1.msra.mxu0 0.0
    %2257 = vmatprep.subr.mxu0 0.0
    %2258 = vmatpush1.msra.mxu0 0.0
    %2259 = vmatprep.subr.mxu0 0.0
    %2260 = vmatpush1.msra.mxu0 0.0
    %2261 = vmatprep.subr.mxu0 0.0
    %2262 = vmatpush1.msra.mxu0 0.0
    %2263 = vmatprep.subr.mxu0 0.0
    %2264 = vmatpush1.msra.mxu0 0.0
    %2265 = vmatprep.subr.mxu0 0.0
    %2266 = vmatpush1.msra.mxu0 0.0
    %2267 = vmatprep.subr.mxu0 0.0
    %2268 = vmatpush1.msra.mxu0 0.0
    %2269 = vmatprep.subr.mxu0 0.0
    %2270 = vmatpush1.msra.mxu0 0.0
    %2271 = vmatprep.subr.mxu0 0.0
    %2272 = vmatpush1.msra.mxu0 0.0
    %2273 = vmatprep.subr.mxu0 0.0
    %2274 = vmatpush1.msra.mxu0 0.0
    %2275 = vmatprep.subr.mxu0 0.0
    %2276 = vmatpush1.msra.mxu0 0.0
    %2277 = vmatprep.subr.mxu0 0.0
    %2278 = vmatpush1.msra.mxu0 0.0
    %2279 = vmatprep.subr.mxu0 0.0
    %2280 = vmatpush1.msra.mxu0 0.0
    %2281 = vmatprep.subr.mxu0 0.0
    %2282 = vmatpush1.msra.mxu0 0.0
    %2283 = vmatprep.subr.mxu0 0.0
    %2284 = vmatpush1.msra.mxu0 0.0
    %2285 = vmatprep.subr.mxu0 0.0
    %2286 = vmatpush1.msra.mxu0 0.0
    %2287 = vmatprep.subr.mxu0 0.0
    %2288 = vmatpush1.msra.mxu0 0.0
    %2289 = vmatprep.subr.mxu0 0.0
    %2290 = vmatpush1.msra.mxu0 0.0
    %2291 = vmatprep.subr.mxu0 0.0
    %2292 = vmatpush1.msra.mxu0 0.0
    %2293 = vmatprep.subr.mxu0 0.0
    %2294 = vmatpush1.msra.mxu0 0.0
    %2295 = vmatprep.subr.mxu0 0.0
    %2296 = vmatpush1.msra.mxu0 0.0
    %2297 = vmatprep.subr.mxu0 0.0
    %2298 = vmatpush1.msra.mxu0 0.0
    %2299 = vmatprep.subr.mxu0 0.0
    %2300 = vmatpush1.msra.mxu0 0.0
    %2301 = vmatprep.subr.mxu0 0.0
    %2302 = vmatpush1.msra.mxu0 0.0
    %2303 = vmatprep.mubr.f32.mxu0 0.0
    %2304 = vmatmul.mubr.f32.gmra.mrb[0].mxu0 %v2237
    %v2305 = vpop.f32.mrb[0].mxu0
    %v2306 = vadd.f32 0.0, %v2305
    %v2307 = vpop.f32.mrb[0].mxu0
    %2308 = vdwg.mxu0
    %v2309 = vcombine.low %v1795, %v1941
    %v2310 = vcombine.high %v1795, %v1941
    %v2312 = vunpack.c.l.s4 1983009808
    %v2313 = vunpack.c.0.s8 %v2312
    %v2314 = vlaneseq
    %v2315 = vshrl.u32 %v2314, 7
    %v2316 = vsub.s32 %v2313, %v2315
    %v2317 = vrot.slane %v2309, %v2316
    %v2319 = vunpack.c.l.s4 1983009808
    %v2320 = vunpack.c.0.s8 %v2319
    %v2321 = vlaneseq
    %v2322 = vshrl.u32 %v2321, 7
    %v2323 = vsub.s32 %v2320, %v2322
    %v2324 = vrot.slane %v2310, %v2323
    %v2325 = vcombine.low %v1868, %v2014
    %v2326 = vcombine.high %v1868, %v2014
    %v2328 = vunpack.c.l.s4 1983009808
    %v2329 = vunpack.c.0.s8 %v2328
    %v2330 = vlaneseq
    %v2331 = vshrl.u32 %v2330, 7
    %v2332 = vsub.s32 %v2329, %v2331
    %v2333 = vrot.slane %v2325, %v2332
    %v2335 = vunpack.c.l.s4 1983009808
    %v2336 = vunpack.c.0.s8 %v2335
    %v2337 = vlaneseq
    %v2338 = vshrl.u32 %v2337, 7
    %v2339 = vsub.s32 %v2336, %v2338
    %v2340 = vrot.slane %v2326, %v2339
    %v2341 = vcombine.low %v2317, %v2333
    %v2342 = vcombine.high %v2317, %v2333
    %v2344 = vunpack.c.l.s4 1934713408
    %v2345 = vunpack.c.0.s8 %v2344
    %v2346 = vlaneseq
    %v2347 = vshrl.u32 %v2346, 7
    %v2348 = vsub.s32 %v2345, %v2347
    %v2349 = vrot.slane %v2341, %v2348
    %v2351 = vunpack.c.l.s4 1934713408
    %v2352 = vunpack.c.0.s8 %v2351
    %v2353 = vlaneseq
    %v2354 = vshrl.u32 %v2353, 7
    %v2355 = vsub.s32 %v2352, %v2354
    %v2356 = vrot.slane %v2342, %v2355
    %v2357 = vcombine.low %v2324, %v2340
    %v2358 = vcombine.high %v2324, %v2340
    %v2360 = vunpack.c.l.s4 1934713408
    %v2361 = vunpack.c.0.s8 %v2360
    %v2362 = vlaneseq
    %v2363 = vshrl.u32 %v2362, 7
    %v2364 = vsub.s32 %v2361, %v2363
    %v2365 = vrot.slane %v2357, %v2364
    %v2367 = vunpack.c.l.s4 1934713408
    %v2368 = vunpack.c.0.s8 %v2367
    %v2369 = vlaneseq
    %v2370 = vshrl.u32 %v2369, 7
    %v2371 = vsub.s32 %v2368, %v2370
    %v2372 = vrot.slane %v2358, %v2371
    %v2373 = vcombine.high %v2349, 0.0
    %v2374 = vcombine.high %v2356, 0.0
    %v2375 = vcombine.high %v2365, 0.0
    %v2376 = vcombine.high %v2372, 0.0
    %v2377 = vcombine.low %v2087, %v2233
    %v2378 = vcombine.high %v2087, %v2233
    %v2380 = vunpack.c.l.s4 1983009808
    %v2381 = vunpack.c.0.s8 %v2380
    %v2382 = vlaneseq
    %v2383 = vshrl.u32 %v2382, 7
    %v2384 = vsub.s32 %v2381, %v2383
    %v2385 = vrot.slane %v2377, %v2384
    %v2387 = vunpack.c.l.s4 1983009808
    %v2388 = vunpack.c.0.s8 %v2387
    %v2389 = vlaneseq
    %v2390 = vshrl.u32 %v2389, 7
    %v2391 = vsub.s32 %v2388, %v2390
    %v2392 = vrot.slane %v2378, %v2391
    %v2393 = vcombine.low %v2160, %v2306
    %v2394 = vcombine.high %v2160, %v2306
    %v2396 = vunpack.c.l.s4 1983009808
    %v2397 = vunpack.c.0.s8 %v2396
    %v2398 = vlaneseq
    %v2399 = vshrl.u32 %v2398, 7
    %v2400 = vsub.s32 %v2397, %v2399
    %v2401 = vrot.slane %v2393, %v2400
    %v2403 = vunpack.c.l.s4 1983009808
    %v2404 = vunpack.c.0.s8 %v2403
    %v2405 = vlaneseq
    %v2406 = vshrl.u32 %v2405, 7
    %v2407 = vsub.s32 %v2404, %v2406
    %v2408 = vrot.slane %v2394, %v2407
    %v2409 = vcombine.low %v2385, %v2401
    %v2410 = vcombine.high %v2385, %v2401
    %v2412 = vunpack.c.l.s4 1934713408
    %v2413 = vunpack.c.0.s8 %v2412
    %v2414 = vlaneseq
    %v2415 = vshrl.u32 %v2414, 7
    %v2416 = vsub.s32 %v2413, %v2415
    %v2417 = vrot.slane %v2409, %v2416
    %v2419 = vunpack.c.l.s4 1934713408
    %v2420 = vunpack.c.0.s8 %v2419
    %v2421 = vlaneseq
    %v2422 = vshrl.u32 %v2421, 7
    %v2423 = vsub.s32 %v2420, %v2422
    %v2424 = vrot.slane %v2410, %v2423
    %v2425 = vcombine.low %v2392, %v2408
    %v2426 = vcombine.high %v2392, %v2408
    %v2428 = vunpack.c.l.s4 1934713408
    %v2429 = vunpack.c.0.s8 %v2428
    %v2430 = vlaneseq
    %v2431 = vshrl.u32 %v2430, 7
    %v2432 = vsub.s32 %v2429, %v2431
    %v2433 = vrot.slane %v2425, %v2432
    %v2435 = vunpack.c.l.s4 1934713408
    %v2436 = vunpack.c.0.s8 %v2435
    %v2437 = vlaneseq
    %v2438 = vshrl.u32 %v2437, 7
    %v2439 = vsub.s32 %v2436, %v2438
    %v2440 = vrot.slane %v2426, %v2439
    %v2441 = vcombine.high %v2417, 0.0
    %v2442 = vcombine.high %v2424, 0.0
    %v2443 = vcombine.high %v2433, 0.0
    %v2444 = vcombine.high %v2440, 0.0
    %v2445 = vcombine.low %v2349, %v2356
    %v2447 = vunpack.c.l.s4 1983009808
    %v2448 = vunpack.c.0.s8 %v2447
    %v2449 = vlaneseq
    %v2450 = vshrl.u32 %v2449, 7
    %v2451 = vsub.s32 %v2448, %v2450
    %v2452 = vrot.slane %v2445, %v2451
    %v2453 = vcombine.low %v2373, %v2374
    %v2455 = vunpack.c.l.s4 1983009808
    %v2456 = vunpack.c.0.s8 %v2455
    %v2457 = vlaneseq
    %v2458 = vshrl.u32 %v2457, 7
    %v2459 = vsub.s32 %v2456, %v2458
    %v2460 = vrot.slane %v2453, %v2459
    %v2461 = vcombine.low %v2365, %v2372
    %v2463 = vunpack.c.l.s4 1983009808
    %v2464 = vunpack.c.0.s8 %v2463
    %v2465 = vlaneseq
    %v2466 = vshrl.u32 %v2465, 7
    %v2467 = vsub.s32 %v2464, %v2466
    %v2468 = vrot.slane %v2461, %v2467
    %v2469 = vcombine.low %v2375, %v2376
    %v2471 = vunpack.c.l.s4 1983009808
    %v2472 = vunpack.c.0.s8 %v2471
    %v2473 = vlaneseq
    %v2474 = vshrl.u32 %v2473, 7
    %v2475 = vsub.s32 %v2472, %v2474
    %v2476 = vrot.slane %v2469, %v2475
    %v2477 = vcombine.low %v2452, %v2460
    %v2478 = vcombine.high %v2452, %v2460
    %v2480 = vunpack.c.l.s4 1934713408
    %v2481 = vunpack.c.0.s8 %v2480
    %v2482 = vlaneseq
    %v2483 = vshrl.u32 %v2482, 7
    %v2484 = vsub.s32 %v2481, %v2483
    %v2485 = vrot.slane %v2477, %v2484
    %v2487 = vunpack.c.l.s4 1934713408
    %v2488 = vunpack.c.0.s8 %v2487
    %v2489 = vlaneseq
    %v2490 = vshrl.u32 %v2489, 7
    %v2491 = vsub.s32 %v2488, %v2490
    %v2492 = vrot.slane %v2478, %v2491
    %v2493 = vcombine.low %v2468, %v2476
    %v2494 = vcombine.high %v2468, %v2476
    %v2496 = vunpack.c.l.s4 1934713408
    %v2497 = vunpack.c.0.s8 %v2496
    %v2498 = vlaneseq
    %v2499 = vshrl.u32 %v2498, 7
    %v2500 = vsub.s32 %v2497, %v2499
    %v2501 = vrot.slane %v2493, %v2500
    %v2503 = vunpack.c.l.s4 1934713408
    %v2504 = vunpack.c.0.s8 %v2503
    %v2505 = vlaneseq
    %v2506 = vshrl.u32 %v2505, 7
    %v2507 = vsub.s32 %v2504, %v2506
    %v2508 = vrot.slane %v2494, %v2507
    %v2509 = vcombine.low %v2485, %v2501
    %v2510 = vcombine.high %v2485, %v2501
    %v2511 = vcombine.low %v2492, %v2508
    %v2512 = vcombine.high %v2492, %v2508
    %v2513 = vcombine.low %v2417, %v2424
    %v2515 = vunpack.c.l.s4 1983009808
    %v2516 = vunpack.c.0.s8 %v2515
    %v2517 = vlaneseq
    %v2518 = vshrl.u32 %v2517, 7
    %v2519 = vsub.s32 %v2516, %v2518
    %v2520 = vrot.slane %v2513, %v2519
    %v2521 = vcombine.low %v2441, %v2442
    %v2523 = vunpack.c.l.s4 1983009808
    %v2524 = vunpack.c.0.s8 %v2523
    %v2525 = vlaneseq
    %v2526 = vshrl.u32 %v2525, 7
    %v2527 = vsub.s32 %v2524, %v2526
    %v2528 = vrot.slane %v2521, %v2527
    %v2529 = vcombine.low %v2433, %v2440
    %v2531 = vunpack.c.l.s4 1983009808
    %v2532 = vunpack.c.0.s8 %v2531
    %v2533 = vlaneseq
    %v2534 = vshrl.u32 %v2533, 7
    %v2535 = vsub.s32 %v2532, %v2534
    %v2536 = vrot.slane %v2529, %v2535
    %v2537 = vcombine.low %v2443, %v2444
    %v2539 = vunpack.c.l.s4 1983009808
    %v2540 = vunpack.c.0.s8 %v2539
    %v2541 = vlaneseq
    %v2542 = vshrl.u32 %v2541, 7
    %v2543 = vsub.s32 %v2540, %v2542
    %v2544 = vrot.slane %v2537, %v2543
    %v2545 = vcombine.low %v2520, %v2528
    %v2546 = vcombine.high %v2520, %v2528
    %v2548 = vunpack.c.l.s4 1934713408
    %v2549 = vunpack.c.0.s8 %v2548
    %v2550 = vlaneseq
    %v2551 = vshrl.u32 %v2550, 7
    %v2552 = vsub.s32 %v2549, %v2551
    %v2553 = vrot.slane %v2545, %v2552
    %v2555 = vunpack.c.l.s4 1934713408
    %v2556 = vunpack.c.0.s8 %v2555
    %v2557 = vlaneseq
    %v2558 = vshrl.u32 %v2557, 7
    %v2559 = vsub.s32 %v2556, %v2558
    %v2560 = vrot.slane %v2546, %v2559
    %v2561 = vcombine.low %v2536, %v2544
    %v2562 = vcombine.high %v2536, %v2544
    %v2564 = vunpack.c.l.s4 1934713408
    %v2565 = vunpack.c.0.s8 %v2564
    %v2566 = vlaneseq
    %v2567 = vshrl.u32 %v2566, 7
    %v2568 = vsub.s32 %v2565, %v2567
    %v2569 = vrot.slane %v2561, %v2568
    %v2571 = vunpack.c.l.s4 1934713408
    %v2572 = vunpack.c.0.s8 %v2571
    %v2573 = vlaneseq
    %v2574 = vshrl.u32 %v2573, 7
    %v2575 = vsub.s32 %v2572, %v2574
    %v2576 = vrot.slane %v2562, %v2575
    %v2577 = vcombine.low %v2553, %v2569
    %v2578 = vcombine.high %v2553, %v2569
    %v2579 = vcombine.low %v2560, %v2576
    %v2580 = vcombine.high %v2560, %v2576
    %2583 = vrot.lane.b32.xlu0 %v2510, 8
    %v2584 = vpop.permute.xlu0 %2583
    %2585 = vrot.lane.b32.xlu0 %v2578, 8
    %v2586 = vpop.permute.xlu0 %2585
    %2591 = vrot.lane.b32.xlu0 %v2511, 16
    %v2592 = vpop.permute.xlu0 %2591
    %2593 = vrot.lane.b32.xlu0 %v2579, 16
    %v2594 = vpop.permute.xlu0 %2593
    %2599 = vrot.lane.b32.xlu0 %v2512, 24
    %v2600 = vpop.permute.xlu0 %2599
    %2601 = vrot.lane.b32.xlu0 %v2580, 24
    %v2602 = vpop.permute.xlu0 %2601
    %v2605 = vsel %vm1028, %v2509, %v2584
    %v2606 = vsel %vm1028, %v2577, %v2586
    %vm2607 = vcmask 130048
    %v2608 = vsel %vm2607, %v2605, %v2592
    %v2609 = vsel %vm2607, %v2606, %v2594
    %vm2610 = vcmask 195584
    %v2611 = vsel %vm2610, %v2608, %v2600
    %v2612 = vsel %vm2610, %v2609, %v2602
    %v2613 = vld [vmem:[%s3] sm:$0xff]
    %v2614 = vld [vmem:[%s3 + $0x8] sm:$0xff]
    %v2615 = vld [vmem:[%s3 + $0x10] sm:$0xff]
    %v2616 = vld [vmem:[%s3 + $0x18] sm:$0xff]
    %v2618 = vsel %vm26, %v2611, 0
    %v2621 = vsel %vm26, %v2612, 0
    %2623 = vmatprep.subr.mxu0 0.0
    %2624 = vmatpush1.msra.mxu0 %v2613
    %2625 = vmatprep.subr.mxu0 0.0
    %2626 = vmatpush1.msra.mxu0 %v2614
    %2627 = vmatprep.subr.mxu0 0.0
    %2628 = vmatpush1.msra.mxu0 %v2615
    %2629 = vmatprep.subr.mxu0 0.0
    %2630 = vmatpush1.msra.mxu0 %v2616
    %2631 = vmatprep.subr.mxu0 0.0
    %2632 = vmatpush1.msra.mxu0 0.0
    %2633 = vmatprep.subr.mxu0 0.0
    %2634 = vmatpush1.msra.mxu0 0.0
    %2635 = vmatprep.subr.mxu0 0.0
    %2636 = vmatpush1.msra.mxu0 0.0
    %2637 = vmatprep.subr.mxu0 0.0
    %2638 = vmatpush1.msra.mxu0 0.0
    %2639 = vmatprep.subr.mxu0 0.0
    %2640 = vmatpush1.msra.mxu0 0.0
    %2641 = vmatprep.subr.mxu0 0.0
    %2642 = vmatpush1.msra.mxu0 0.0
    %2643 = vmatprep.subr.mxu0 0.0
    %2644 = vmatpush1.msra.mxu0 0.0
    %2645 = vmatprep.subr.mxu0 0.0
    %2646 = vmatpush1.msra.mxu0 0.0
    %2647 = vmatprep.subr.mxu0 0.0
    %2648 = vmatpush1.msra.mxu0 0.0
    %2649 = vmatprep.subr.mxu0 0.0
    %2650 = vmatpush1.msra.mxu0 0.0
    %2651 = vmatprep.subr.mxu0 0.0
    %2652 = vmatpush1.msra.mxu0 0.0
    %2653 = vmatprep.subr.mxu0 0.0
    %2654 = vmatpush1.msra.mxu0 0.0
    %2655 = vmatprep.subr.mxu0 0.0
    %2656 = vmatpush1.msra.mxu0 0.0
    %2657 = vmatprep.subr.mxu0 0.0
    %2658 = vmatpush1.msra.mxu0 0.0
    %2659 = vmatprep.subr.mxu0 0.0
    %2660 = vmatpush1.msra.mxu0 0.0
    %2661 = vmatprep.subr.mxu0 0.0
    %2662 = vmatpush1.msra.mxu0 0.0
    %2663 = vmatprep.subr.mxu0 0.0
    %2664 = vmatpush1.msra.mxu0 0.0
    %2665 = vmatprep.subr.mxu0 0.0
    %2666 = vmatpush1.msra.mxu0 0.0
    %2667 = vmatprep.subr.mxu0 0.0
    %2668 = vmatpush1.msra.mxu0 0.0
    %2669 = vmatprep.subr.mxu0 0.0
    %2670 = vmatpush1.msra.mxu0 0.0
    %2671 = vmatprep.subr.mxu0 0.0
    %2672 = vmatpush1.msra.mxu0 0.0
    %2673 = vmatprep.subr.mxu0 0.0
    %2674 = vmatpush1.msra.mxu0 0.0
    %2675 = vmatprep.subr.mxu0 0.0
    %2676 = vmatpush1.msra.mxu0 0.0
    %2677 = vmatprep.subr.mxu0 0.0
    %2678 = vmatpush1.msra.mxu0 0.0
    %2679 = vmatprep.subr.mxu0 0.0
    %2680 = vmatpush1.msra.mxu0 0.0
    %2681 = vmatprep.subr.mxu0 0.0
    %2682 = vmatpush1.msra.mxu0 0.0
    %2683 = vmatprep.subr.mxu0 0.0
    %2684 = vmatpush1.msra.mxu0 0.0
    %2685 = vmatprep.subr.mxu0 0.0
    %2686 = vmatpush1.msra.mxu0 0.0
    %2687 = vmatprep.mubr.f32.mxu0 0.0
    %2688 = vmatmul.mubr.f32.gmra.mrb[0].mxu0 %v2618
    %v2689 = vpop.f32.mrb[0].mxu0
    %v2690 = vadd.f32 0.0, %v2689
    %v2691 = vpop.f32.mrb[0].mxu0
    %2692 = vmatprep.mubr.f32.mxu0 0.0
    %2693 = vmatmul.mubr.f32.gmra.mrb[0].mxu0 %v2621
    %v2694 = vpop.f32.mrb[0].mxu0
    %v2695 = vadd.f32 0.0, %v2694
    %v2696 = vpop.f32.mrb[0].mxu0
    %2697 = vdwg.mxu0
    %v2698 = vadd.f32 %v24, %v2690
    %v2699 = vadd.f32 %v25, %v2695
    %v2700 = vld [vmem:[%s1 + $0x1] sm:$0x1]
    %v2701 = vlaneseq
    %v2702 = vshrl.u32 %v2701, 7
    %v2703 = vsub.s32 0, %v2702
    %v2704 = vrot.slane %v2700, %v2703
    %v2705 = vadd.f32 %v2698, %v2704
    %v2706 = vadd.f32 %v2699, %v2704
    %v2707 = vsel %vm26, %v2705, 0.0
    %2708 = vadd.xlane.f32.xlu0 %v2707
    %v2709 = vpop.xlane.xlu0 %2708
    %v2710 = vsel %vm26, %v2706, 0.0
    %2711 = vadd.xlane.f32.xlu0 %v2710
    %v2712 = vpop.xlane.xlu0 %2711
    %v2713 = vmul.f32 %v2709, %v33
    %v2714 = vmul.f32 %v2712, %v33
    %v2715 = vsub.f32 %v2705, %v2713
    %v2716 = vsub.f32 %v2706, %v2714
    %v2717 = vmul.f32 %v2715, %v2715
    %v2718 = vmul.f32 %v2716, %v2716
    %v2719 = vsel %vm26, %v2717, 0.0
    %2720 = vadd.xlane.f32.xlu0 %v2719
    %v2721 = vpop.xlane.xlu0 %2720
    %v2722 = vsel %vm26, %v2718, 0.0
    %2723 = vadd.xlane.f32.xlu0 %v2722
    %v2724 = vpop.xlane.xlu0 %2723
    %v2725 = vmul.f32 %v2721, %v33
    %v2726 = vmul.f32 %v2724, %v33
    %v2727 = vadd.f32 %v2725, 1e-05
    %v2728 = vadd.f32 %v2726, 1e-05
    %v2729 = vrsqrt.pop %v2727
    %v2730 = vrsqrt.pop %v2728
    %v2731 = vmul.f32 %v2715, %v2729
    %v2732 = vmul.f32 %v2716, %v2730
    %v2733 = vld [vmem:[%s4] sm:$0xff]
    %v2734 = vld [vmem:[%s4 + $0x8] sm:$0xff]
    %v2735 = vld [vmem:[%s4 + $0x10] sm:$0xff]
    %v2736 = vld [vmem:[%s4 + $0x18] sm:$0xff]
    %v2737 = vld [vmem:[%s1 + $0x2] sm:$0x1]
    %v2738 = vlaneseq
    %v2739 = vshrl.u32 %v2738, 7
    %v2740 = vsub.s32 0, %v2739
    %v2741 = vrot.slane %v2737, %v2740
    %v2743 = vsel %vm26, %v2731, 0
    %v2746 = vsel %vm26, %v2732, 0
    %2748 = vmatprep.subr.mxu0 0.0
    %2749 = vmatpush1.msra.mxu0 %v2733
    %2750 = vmatprep.subr.mxu0 0.0
    %2751 = vmatpush1.msra.mxu0 %v2734
    %2752 = vmatprep.subr.mxu0 0.0
    %2753 = vmatpush1.msra.mxu0 %v2735
    %2754 = vmatprep.subr.mxu0 0.0
    %2755 = vmatpush1.msra.mxu0 %v2736
    %2756 = vmatprep.subr.mxu0 0.0
    %2757 = vmatpush1.msra.mxu0 0.0
    %2758 = vmatprep.subr.mxu0 0.0
    %2759 = vmatpush1.msra.mxu0 0.0
    %2760 = vmatprep.subr.mxu0 0.0
    %2761 = vmatpush1.msra.mxu0 0.0
    %2762 = vmatprep.subr.mxu0 0.0
    %2763 = vmatpush1.msra.mxu0 0.0
    %2764 = vmatprep.subr.mxu0 0.0
    %2765 = vmatpush1.msra.mxu0 0.0
    %2766 = vmatprep.subr.mxu0 0.0
    %2767 = vmatpush1.msra.mxu0 0.0
    %2768 = vmatprep.subr.mxu0 0.0
    %2769 = vmatpush1.msra.mxu0 0.0
    %2770 = vmatprep.subr.mxu0 0.0
    %2771 = vmatpush1.msra.mxu0 0.0
    %2772 = vmatprep.subr.mxu0 0.0
    %2773 = vmatpush1.msra.mxu0 0.0
    %2774 = vmatprep.subr.mxu0 0.0
    %2775 = vmatpush1.msra.mxu0 0.0
    %2776 = vmatprep.subr.mxu0 0.0
    %2777 = vmatpush1.msra.mxu0 0.0
    %2778 = vmatprep.subr.mxu0 0.0
    %2779 = vmatpush1.msra.mxu0 0.0
    %2780 = vmatprep.subr.mxu0 0.0
    %2781 = vmatpush1.msra.mxu0 0.0
    %2782 = vmatprep.subr.mxu0 0.0
    %2783 = vmatpush1.msra.mxu0 0.0
    %2784 = vmatprep.subr.mxu0 0.0
    %2785 = vmatpush1.msra.mxu0 0.0
    %2786 = vmatprep.subr.mxu0 0.0
    %2787 = vmatpush1.msra.mxu0 0.0
    %2788 = vmatprep.subr.mxu0 0.0
    %2789 = vmatpush1.msra.mxu0 0.0
    %2790 = vmatprep.subr.mxu0 0.0
    %2791 = vmatpush1.msra.mxu0 0.0
    %2792 = vmatprep.subr.mxu0 0.0
    %2793 = vmatpush1.msra.mxu0 0.0
    %2794 = vmatprep.subr.mxu0 0.0
    %2795 = vmatpush1.msra.mxu0 0.0
    %2796 = vmatprep.subr.mxu0 0.0
    %2797 = vmatpush1.msra.mxu0 0.0
    %2798 = vmatprep.subr.mxu0 0.0
    %2799 = vmatpush1.msra.mxu0 0.0
    %2800 = vmatprep.subr.mxu0 0.0
    %2801 = vmatpush1.msra.mxu0 0.0
    %2802 = vmatprep.subr.mxu0 0.0
    %2803 = vmatpush1.msra.mxu0 0.0
    %2804 = vmatprep.subr.mxu0 0.0
    %2805 = vmatpush1.msra.mxu0 0.0
    %2806 = vmatprep.subr.mxu0 0.0
    %2807 = vmatpush1.msra.mxu0 0.0
    %2808 = vmatprep.subr.mxu0 0.0
    %2809 = vmatpush1.msra.mxu0 0.0
    %2810 = vmatprep.subr.mxu0 0.0
    %2811 = vmatpush1.msra.mxu0 0.0
    %2812 = vmatprep.mubr.f32.mxu0 0.0
    %2813 = vmatmul.mubr.f32.gmra.mrb[0].mxu0 %v2743
    %v2814 = vpop.f32.mrb[0].mxu0
    %v2815 = vadd.f32 %v2741, %v2814
    %v2816 = vpop.f32.mrb[0].mxu0
    %2817 = vmatprep.mubr.f32.mxu0 0.0
    %2818 = vmatmul.mubr.f32.gmra.mrb[0].mxu0 %v2746
    %v2819 = vpop.f32.mrb[0].mxu0
    %v2820 = vadd.f32 %v2741, %v2819
    %v2821 = vpop.f32.mrb[0].mxu0
    %2822 = vdwg.mxu0
    %v2823 = vmul.f32 %v2815, 0.5
    %v2824 = vmul.f32 %v2820, 0.5
    %v2825 = vmul.f32 %v2815, 0.70710677
    %v2826 = vmul.f32 %v2820, 0.70710677
    %v2827 = verf.f32.pop %v2825
    %v2828 = verf.f32.pop %v2826
    %v2829 = vadd.f32 %v2827, 1.0
    %v2830 = vadd.f32 %v2828, 1.0
    %v2831 = vmul.f32 %v2823, %v2829
    %v2832 = vmul.f32 %v2824, %v2830
    %v2833 = vld [vmem:[%s5] sm:$0xff]
    %v2834 = vld [vmem:[%s5 + $0x8] sm:$0xff]
    %v2835 = vld [vmem:[%s5 + $0x10] sm:$0xff]
    %v2836 = vld [vmem:[%s5 + $0x18] sm:$0xff]
    %v2837 = vld [vmem:[%s5 + $0x20] sm:$0xff]
    %v2838 = vld [vmem:[%s5 + $0x28] sm:$0xff]
    %v2839 = vld [vmem:[%s5 + $0x30] sm:$0xff]
    %v2840 = vld [vmem:[%s5 + $0x38] sm:$0xff]
    %v2841 = vld [vmem:[%s5 + $0x40] sm:$0xff]
    %v2842 = vld [vmem:[%s5 + $0x48] sm:$0xff]
    %v2843 = vld [vmem:[%s5 + $0x50] sm:$0xff]
    %v2844 = vld [vmem:[%s5 + $0x58] sm:$0xff]
    %v2845 = vld [vmem:[%s5 + $0x60] sm:$0xff]
    %v2846 = vld [vmem:[%s5 + $0x68] sm:$0xff]
    %v2847 = vld [vmem:[%s5 + $0x70] sm:$0xff]
    %v2848 = vld [vmem:[%s5 + $0x78] sm:$0xff]
    %v2849 = vld [vmem:[%s1 + $0x3] sm:$0x1]
    %v2850 = vlaneseq
    %v2851 = vshrl.u32 %v2850, 7
    %v2852 = vsub.s32 0, %v2851
    %v2853 = vrot.slane %v2849, %v2852
    %2854 = vmatprep.subr.mxu0 0.0
    %2855 = vmatpush1.msra.mxu0 %v2833
    %2856 = vmatprep.subr.mxu0 0.0
    %2857 = vmatpush1.msra.mxu0 %v2834
    %2858 = vmatprep.subr.mxu0 0.0
    %2859 = vmatpush1.msra.mxu0 %v2835
    %2860 = vmatprep.subr.mxu0 0.0
    %2861 = vmatpush1.msra.mxu0 %v2836
    %2862 = vmatprep.subr.mxu0 0.0
    %2863 = vmatpush1.msra.mxu0 %v2837
    %2864 = vmatprep.subr.mxu0 0.0
    %2865 = vmatpush1.msra.mxu0 %v2838
    %2866 = vmatprep.subr.mxu0 0.0
    %2867 = vmatpush1.msra.mxu0 %v2839
    %2868 = vmatprep.subr.mxu0 0.0
    %2869 = vmatpush1.msra.mxu0 %v2840
    %2870 = vmatprep.subr.mxu0 0.0
    %2871 = vmatpush1.msra.mxu0 %v2841
    %2872 = vmatprep.subr.mxu0 0.0
    %2873 = vmatpush1.msra.mxu0 %v2842
    %2874 = vmatprep.subr.mxu0 0.0
    %2875 = vmatpush1.msra.mxu0 %v2843
    %2876 = vmatprep.subr.mxu0 0.0
    %2877 = vmatpush1.msra.mxu0 %v2844
    %2878 = vmatprep.subr.mxu0 0.0
    %2879 = vmatpush1.msra.mxu0 %v2845
    %2880 = vmatprep.subr.mxu0 0.0
    %2881 = vmatpush1.msra.mxu0 %v2846
    %2882 = vmatprep.subr.mxu0 0.0
    %2883 = vmatpush1.msra.mxu0 %v2847
    %2884 = vmatprep.subr.mxu0 0.0
    %2885 = vmatpush1.msra.mxu0 %v2848
    %2886 = vmatprep.subr.mxu0 0.0
    %2887 = vmatpush1.msra.mxu0 0.0
    %2888 = vmatprep.subr.mxu0 0.0
    %2889 = vmatpush1.msra.mxu0 0.0
    %2890 = vmatprep.subr.mxu0 0.0
    %2891 = vmatpush1.msra.mxu0 0.0
    %2892 = vmatprep.subr.mxu0 0.0
    %2893 = vmatpush1.msra.mxu0 0.0
    %2894 = vmatprep.subr.mxu0 0.0
    %2895 = vmatpush1.msra.mxu0 0.0
    %2896 = vmatprep.subr.mxu0 0.0
    %2897 = vmatpush1.msra.mxu0 0.0
    %2898 = vmatprep.subr.mxu0 0.0
    %2899 = vmatpush1.msra.mxu0 0.0
    %2900 = vmatprep.subr.mxu0 0.0
    %2901 = vmatpush1.msra.mxu0 0.0
    %2902 = vmatprep.subr.mxu0 0.0
    %2903 = vmatpush1.msra.mxu0 0.0
    %2904 = vmatprep.subr.mxu0 0.0
    %2905 = vmatpush1.msra.mxu0 0.0
    %2906 = vmatprep.subr.mxu0 0.0
    %2907 = vmatpush1.msra.mxu0 0.0
    %2908 = vmatprep.subr.mxu0 0.0
    %2909 = vmatpush1.msra.mxu0 0.0
    %2910 = vmatprep.subr.mxu0 0.0
    %2911 = vmatpush1.msra.mxu0 0.0
    %2912 = vmatprep.subr.mxu0 0.0
    %2913 = vmatpush1.msra.mxu0 0.0
    %2914 = vmatprep.subr.mxu0 0.0
    %2915 = vmatpush1.msra.mxu0 0.0
    %2916 = vmatprep.subr.mxu0 0.0
    %2917 = vmatpush1.msra.mxu0 0.0
    %2918 = vmatprep.mubr.f32.mxu0 0.0
    %2919 = vmatmul.mubr.f32.gmra.mrb[0].mxu0 %v2831
    %v2920 = vpop.f32.mrb[0].mxu0
    %v2921 = vadd.f32 %v2853, %v2920
    %v2922 = vpop.f32.mrb[0].mxu0
    %2923 = vmatprep.mubr.f32.mxu0 0.0
    %2924 = vmatmul.mubr.f32.gmra.mrb[0].mxu0 %v2832
    %v2925 = vpop.f32.mrb[0].mxu0
    %v2926 = vadd.f32 %v2853, %v2925
    %v2927 = vpop.f32.mrb[0].mxu0
    %2928 = vdwg.mxu0
    %v2929 = vadd.f32 %v2705, %v2921
    %v2930 = vadd.f32 %v2706, %v2926
    %2931 = vst.msk [vmem:[#allocation2] sm:$0xff] %vm26, %v2929
    %2932 = vst.msk [vmem:[#allocation2 + $0x8] sm:$0xff] %vm26, %v2930
    // Predicated region
    $region26: #{tpu_custom_call.1} parent=1 // pred_check
      _
    $region27: #{tpu_custom_call.1} parent=1 // pred_check_branch
      %2934 = sbr.rel (0) target = $region29
    $region28: #{tpu_custom_call.1} parent=1 // pred_region
      %s2936 = ssub.s32 256, 256
      %2937 = vsyncadd [#allocation3], %s2936
      %s2938 = sshll.u32 [#allocation2], 4
      %s2939 = int_to_ptr.vmem [resolvable:$true] %s2938
      %2944 = dma.vmem_to_hbm [thread:$0]  %s2939, 256, %s6, [#allocation3], 128, 128, 8
    $region29: #{tpu_custom_call.1} parent=1 // pred_fallthru
      _
    // Predicated region
    $region30: #{tpu_custom_call.1} parent=1 // pred_check
      _
    $region31: #{tpu_custom_call.1} parent=1 // pred_check_branch
      %2946 = sbr.rel (0) target = $region33
    $region32: #{tpu_custom_call.1} parent=1 // pred_region
      %2947 = dma.done [#allocation3], 256
    $region33: #{tpu_custom_call.1} parent=1 // pred_fallthru
      _
    %2948 = vsyncpa [#allocation3], 1

</llo_original>
